<compile_context>
chip_gen: v7x
topology: tpu7x:2x2x1
jax: 0.10.0
libtpu: 0.0.40
codegen_flags: <defaults>
</compile_context>

<pallas_src>
import functools

import jax
import jax.numpy as jnp
from jax.experimental import pallas as pl
from jax.experimental.pallas import tpu as pltpu


_LANE = 128
# Safe on all generations: < v7x's 64 MiB physical VMEM, above the 16/32 MiB
# default scoped limits on v5e / v6e+.
_VMEM_LIMIT_BYTES = 48 * 1024 * 1024


def _round_up(n, m):
    return ((n + m - 1) // m) * m


def _mlp_kernel(x_ref,
                w1_ref, b1_ref,
                w2_ref, b2_ref,
                w3_ref, b3_ref,
                w4_ref, b4_ref,
                w5_ref, b5_ref,
                o_ref):
    """Fused 5-layer MLP for one batch tile.

    Matmuls run on the MXU in the weights' dtype (f32 / bf16) with f32
    accumulation; bias add and ReLU stay in f32 on the VPU.
    """

    def layer(h, w_ref, b_ref, relu):
        z = jnp.dot(h.astype(w_ref.dtype), w_ref[...],
                    preferred_element_type=jnp.float32) + b_ref[...]
        return jnp.maximum(z, 0.0) if relu else z

    h = x_ref[...]
    h = layer(h, w1_ref, b1_ref, True)
    h = layer(h, w2_ref, b2_ref, True)
    h = layer(h, w3_ref, b3_ref, True)
    h = layer(h, w4_ref, b4_ref, True)
    o_ref[...] = layer(h, w5_ref, b5_ref, False).astype(o_ref.dtype)


def prepare_params(params, compute_dtype=jnp.float32, pad_output_lanes=False):
    """One-time parameter preprocessing (call once, outside the hot loop).

    * Transposes PyTorch [out, in] weights to [in, out] matmul layout.
    * Reshapes biases to [1, out].
    * Optionally casts weights to bf16 (recommended on v5e/v6e/v7x alike: the
      MXU takes bf16 at full rate and accumulation stays f32; note activations
      are also fed to the MXU in compute_dtype).
    * Optionally zero-pads the final layer's output dim to a multiple of 128
      lanes (only worth it if the output-store slot ever binds; by default the
      kernel writes the true ac_dim width to minimize HBM writeback).

    Returns (flat_params_tuple, ac_dim).
    """
    ac_dim = int(params[-1][0].shape[0])
    n_layers = len(params)
    flat = []
    for li, (w, b) in enumerate(params):
        w = jnp.asarray(w, jnp.float32).T            # [in, out]
        b = jnp.asarray(b, jnp.float32)[None, :]     # [1, out]
        if pad_output_lanes and li == n_layers - 1:
            ac_pad = _round_up(ac_dim, _LANE)
            if ac_pad != ac_dim:
                w = jnp.pad(w, ((0, 0), (0, ac_pad - ac_dim)))
                b = jnp.pad(b, ((0, 0), (0, ac_pad - ac_dim)))
        flat.append(w.astype(compute_dtype))
        flat.append(b)                               # biases stay f32
    return tuple(flat), ac_dim


def _default_min_grid_steps():
    """>=2 grid steps on v7x so both TensorCores get batch work; 1 elsewhere."""
    try:
        kind = jax.local_devices()[0].device_kind.lower()
    except Exception:
        return 1
    return 2 if "v7" in kind else 1


@functools.partial(
    jax.jit,
    static_argnames=("ac_dim", "batch_tile", "min_grid_steps",
                     "single_buffer_weights"))
def _policy_forward_impl(x, flat_params, *, ac_dim, batch_tile,
                         min_grid_steps, single_buffer_weights):
    B, ob_dim = x.shape
    ac_out = flat_params[-1].shape[1]   # == ac_dim unless pad_output_lanes=True

    # Batch tile: as large as possible (amortizes per-grid-step overhead, feeds
    # the MXU long LHS streams), rounded to the sublane packing of x's dtype,
    # but capped so the grid keeps >= min_grid_steps steps (megacore on v7x).
    sublane = 16 if x.dtype == jnp.bfloat16 else 8
    tile_cap = _round_up(pl.cdiv(B, min_grid_steps), sublane)
    tile_b = max(sublane, min(_round_up(batch_tile, sublane), tile_cap))
    grid = (pl.cdiv(B, tile_b),)

    # Weights/biases are grid-invariant (index_map always (0, 0)) -> single
    # buffer them to halve their VMEM footprint.
    weight_mode = pl.Buffered(1) if single_buffer_weights else None

    in_specs = [pl.BlockSpec((tile_b, ob_dim), lambda i: (i, 0))]
    for a in flat_params:
        in_specs.append(
            pl.BlockSpec(a.shape, lambda i: (0, 0), pipeline_mode=weight_mode))
    out_specs = pl.BlockSpec((tile_b, ac_out), lambda i: (i, 0))

    # Advisory cost estimate for the XLA scheduler.
    weights = flat_params[0::2]
    flops = 2 * B * sum(int(w.shape[0]) * int(w.shape[1]) for w in weights)
    bytes_accessed = (
        int(x.size) * x.dtype.itemsize
        + sum(int(a.size) * a.dtype.itemsize for a in flat_params)
        + B * ac_out * 4
    )
    cost = pl.CostEstimate(flops=flops, transcendentals=0,
                           bytes_accessed=bytes_accessed)

    out = pl.pallas_call(
        _mlp_kernel,
        out_shape=jax.ShapeDtypeStruct((B, ac_out), jnp.float32),
        grid=grid,
        in_specs=in_specs,
        out_specs=out_specs,
        compiler_params=pltpu.CompilerParams(
            dimension_semantics=("parallel",),
            vmem_limit_bytes=_VMEM_LIMIT_BYTES),
        cost_estimate=cost,
    )(x, *flat_params)

    if ac_out != ac_dim:          # only when prepare_params padded the output
        out = out[:, :ac_dim]
    return out


_SINGLE_BUFFER_WEIGHTS_OK = True


def policy_forward(x, flat_params, ac_dim, *, batch_tile=512,
                   min_grid_steps=None):
    """Runs the Policy MLP forward pass via a single fused Pallas TPU kernel.

    x:              [B, ob_dim] float32 (or bfloat16).
    flat_params:    output of prepare_params (weights [in,out], biases [1,out]).
    ac_dim:         true action dimension.
    batch_tile:     max rows per grid step (default 512; sweep up to 1024+ for
                    very large batches).
    min_grid_steps: minimum grid steps; defaults to 2 on v7x (2 TensorCores),
                    1 on v5e/v6e.
    """
    global _SINGLE_BUFFER_WEIGHTS_OK
    if min_grid_steps is None:
        min_grid_steps = _default_min_grid_steps()
    if _SINGLE_BUFFER_WEIGHTS_OK:
        try:
            return _policy_forward_impl(
                x, flat_params, ac_dim=int(ac_dim), batch_tile=int(batch_tile),
                min_grid_steps=int(min_grid_steps), single_buffer_weights=True)
        except Exception:
            # jax build without BlockSpec pipeline_mode support: fall back to
            # default (double-buffered) grid-invariant weights once, remember it.
            _SINGLE_BUFFER_WEIGHTS_OK = False
    return _policy_forward_impl(
        x, flat_params, ac_dim=int(ac_dim), batch_tile=int(batch_tile),
        min_grid_steps=int(min_grid_steps), single_buffer_weights=False)


def init_policy_params(key, ob_dim, ac_dim, embedding_dims):
    """Deterministic init matching nn.Linear default: U(-1/sqrt(fan_in), 1/sqrt(fan_in))."""
    dims = [ob_dim, embedding_dims, embedding_dims, embedding_dims,
            embedding_dims, ac_dim]
    params = []
    for fan_in, fan_out in zip(dims[:-1], dims[1:]):
        key, kw, kb = jax.random.split(key, 3)
        bound = 1.0 / jnp.sqrt(jnp.float32(fan_in))
        w = jax.random.uniform(kw, (fan_out, fan_in), jnp.float32, -bound, bound)
        b = jax.random.uniform(kb, (fan_out,), jnp.float32, -bound, bound)
        params.append((w, b))
    return params


def _reference_forward(x, params):
    h = x
    for i, (w, b) in enumerate(params):
        h = h @ w.T + b
        if i < len(params) - 1:
            h = jnp.maximum(h, 0.0)
    return h


if __name__ == "__main__":
    # Small shapes consistent with the module (ob_dim/ac_dim free, arch fixed).
    batch, ob_dim, ac_dim, embedding_dims = 64, 16, 8, 128

    key = jax.random.PRNGKey(0)
    key, kx = jax.random.split(key)
    x = jax.random.normal(kx, (batch, ob_dim), jnp.float32)

    params = init_policy_params(key, ob_dim, ac_dim, embedding_dims)

    # One-time preprocessing (hoisted out of the hot path). f32 weights here so
    # the correctness check is exact; pass compute_dtype=jnp.bfloat16 for the
    # halved-bandwidth production path (all TPU generations).
    flat_params, ac_dim_true = prepare_params(params)

    # Test 1: single big batch tile (tile clamped to B; >=2 grid steps on v7x).
    out = jax.block_until_ready(policy_forward(x, flat_params, ac_dim_true))
    ref = _reference_forward(x, params)
    assert out.shape == (batch, ac_dim)
    assert jnp.allclose(out, ref, atol=1e-4, rtol=1e-4)

    # Test 2: multi-step grid with a ragged last block (B=40, tile=16 -> 3 steps).
    key, kx2 = jax.random.split(key)
    x2 = jax.random.normal(kx2, (40, ob_dim), jnp.float32)
    out2 = jax.block_until_ready(
        policy_forward(x2, flat_params, ac_dim_true, batch_tile=16))
    ref2 = _reference_forward(x2, params)
    assert out2.shape == (40, ac_dim)
    assert jnp.allclose(out2, ref2, atol=1e-4, rtol=1e-4)

    print("KERNEL_OK")
</pallas_src>

<mosaic_0001>
module attributes {stable_mosaic.version = 11 : i64} {
  func.func @_mlp_kernel(%arg0: i32, %arg1: memref<64x16xf32, #tpu.memory_space<vmem>>, %arg2: memref<16x128xf32, #tpu.memory_space<vmem>>, %arg3: memref<1x128xf32, #tpu.memory_space<vmem>>, %arg4: memref<128x128xf32, #tpu.memory_space<vmem>>, %arg5: memref<1x128xf32, #tpu.memory_space<vmem>>, %arg6: memref<128x128xf32, #tpu.memory_space<vmem>>, %arg7: memref<1x128xf32, #tpu.memory_space<vmem>>, %arg8: memref<128x128xf32, #tpu.memory_space<vmem>>, %arg9: memref<1x128xf32, #tpu.memory_space<vmem>>, %arg10: memref<128x8xf32, #tpu.memory_space<vmem>>, %arg11: memref<1x8xf32, #tpu.memory_space<vmem>>, %arg12: memref<64x8xf32, #tpu.memory_space<vmem>>) attributes {dimension_semantics = [#tpu.dimension_semantics<parallel>], iteration_bounds = array<i64: 1>, scalar_prefetch = 0 : i64, scratch_operands = 0 : i64, tpu.core_type = #tpu.core_type<tc>, window_params = [{transform_indices = @transform_0, window_bounds = array<i64: 64, 16>}, {pipeline_mode = #tpu.pipeline_mode<synchronous>, transform_indices = @transform_1, window_bounds = array<i64: 16, 128>}, {pipeline_mode = #tpu.pipeline_mode<synchronous>, transform_indices = @transform_2, window_bounds = array<i64: 1, 128>}, {pipeline_mode = #tpu.pipeline_mode<synchronous>, transform_indices = @transform_3, window_bounds = array<i64: 128, 128>}, {pipeline_mode = #tpu.pipeline_mode<synchronous>, transform_indices = @transform_4, window_bounds = array<i64: 1, 128>}, {pipeline_mode = #tpu.pipeline_mode<synchronous>, transform_indices = @transform_5, window_bounds = array<i64: 128, 128>}, {pipeline_mode = #tpu.pipeline_mode<synchronous>, transform_indices = @transform_6, window_bounds = array<i64: 1, 128>}, {pipeline_mode = #tpu.pipeline_mode<synchronous>, transform_indices = @transform_7, window_bounds = array<i64: 128, 128>}, {pipeline_mode = #tpu.pipeline_mode<synchronous>, transform_indices = @transform_8, window_bounds = array<i64: 1, 128>}, {pipeline_mode = #tpu.pipeline_mode<synchronous>, transform_indices = @transform_9, window_bounds = array<i64: 128, 8>}, {pipeline_mode = #tpu.pipeline_mode<synchronous>, transform_indices = @transform_10, window_bounds = array<i64: 1, 8>}, {transform_indices = @transform_11, window_bounds = array<i64: 64, 8>}]} {
    %c0 = arith.constant 0 : index
    %c0_0 = arith.constant 0 : index
    %0 = vector.load %arg1[%c0, %c0_0] : memref<64x16xf32, #tpu.memory_space<vmem>>, vector<64x16xf32>
    %c0_1 = arith.constant 0 : index
    %c0_2 = arith.constant 0 : index
    %1 = vector.load %arg2[%c0_1, %c0_2] : memref<16x128xf32, #tpu.memory_space<vmem>>, vector<16x128xf32>
    %cst = arith.constant dense<0.000000e+00> : vector<64x128xf32>
    %2 = tpu.matmul %0, %1, %cst {dimension_numbers = #tpu.dot_dimension_numbers<[1], [0], [0], [1], [0, 0, 1, 1], [], []>} : vector<64x16xf32>, vector<16x128xf32>, vector<64x128xf32> -> vector<64x128xf32>
    %c0_3 = arith.constant 0 : index
    %c0_4 = arith.constant 0 : index
    %3 = vector.load %arg3[%c0_3, %c0_4] : memref<1x128xf32, #tpu.memory_space<vmem>>, vector<1x128xf32>
    %4 = vector.broadcast %3 : vector<1x128xf32> to vector<64x128xf32>
    %5 = arith.addf %2, %4 : vector<64x128xf32>
    %cst_5 = arith.constant 0.000000e+00 : f32
    %6 = vector.broadcast %cst_5 : f32 to vector<64x128xf32>
    %7 = arith.maximumf %5, %6 : vector<64x128xf32>
    %c0_6 = arith.constant 0 : index
    %c0_7 = arith.constant 0 : index
    %8 = vector.load %arg4[%c0_6, %c0_7] : memref<128x128xf32, #tpu.memory_space<vmem>>, vector<128x128xf32>
    %cst_8 = arith.constant dense<0.000000e+00> : vector<64x128xf32>
    %9 = tpu.matmul %7, %8, %cst_8 {dimension_numbers = #tpu.dot_dimension_numbers<[1], [0], [0], [1], [0, 0, 1, 1], [], []>} : vector<64x128xf32>, vector<128x128xf32>, vector<64x128xf32> -> vector<64x128xf32>
    %c0_9 = arith.constant 0 : index
    %c0_10 = arith.constant 0 : index
    %10 = vector.load %arg5[%c0_9, %c0_10] : memref<1x128xf32, #tpu.memory_space<vmem>>, vector<1x128xf32>
    %11 = vector.broadcast %10 : vector<1x128xf32> to vector<64x128xf32>
    %12 = arith.addf %9, %11 : vector<64x128xf32>
    %cst_11 = arith.constant 0.000000e+00 : f32
    %13 = vector.broadcast %cst_11 : f32 to vector<64x128xf32>
    %14 = arith.maximumf %12, %13 : vector<64x128xf32>
    %c0_12 = arith.constant 0 : index
    %c0_13 = arith.constant 0 : index
    %15 = vector.load %arg6[%c0_12, %c0_13] : memref<128x128xf32, #tpu.memory_space<vmem>>, vector<128x128xf32>
    %cst_14 = arith.constant dense<0.000000e+00> : vector<64x128xf32>
    %16 = tpu.matmul %14, %15, %cst_14 {dimension_numbers = #tpu.dot_dimension_numbers<[1], [0], [0], [1], [0, 0, 1, 1], [], []>} : vector<64x128xf32>, vector<128x128xf32>, vector<64x128xf32> -> vector<64x128xf32>
    %c0_15 = arith.constant 0 : index
    %c0_16 = arith.constant 0 : index
    %17 = vector.load %arg7[%c0_15, %c0_16] : memref<1x128xf32, #tpu.memory_space<vmem>>, vector<1x128xf32>
    %18 = vector.broadcast %17 : vector<1x128xf32> to vector<64x128xf32>
    %19 = arith.addf %16, %18 : vector<64x128xf32>
    %cst_17 = arith.constant 0.000000e+00 : f32
    %20 = vector.broadcast %cst_17 : f32 to vector<64x128xf32>
    %21 = arith.maximumf %19, %20 : vector<64x128xf32>
    %c0_18 = arith.constant 0 : index
    %c0_19 = arith.constant 0 : index
    %22 = vector.load %arg8[%c0_18, %c0_19] : memref<128x128xf32, #tpu.memory_space<vmem>>, vector<128x128xf32>
    %cst_20 = arith.constant dense<0.000000e+00> : vector<64x128xf32>
    %23 = tpu.matmul %21, %22, %cst_20 {dimension_numbers = #tpu.dot_dimension_numbers<[1], [0], [0], [1], [0, 0, 1, 1], [], []>} : vector<64x128xf32>, vector<128x128xf32>, vector<64x128xf32> -> vector<64x128xf32>
    %c0_21 = arith.constant 0 : index
    %c0_22 = arith.constant 0 : index
    %24 = vector.load %arg9[%c0_21, %c0_22] : memref<1x128xf32, #tpu.memory_space<vmem>>, vector<1x128xf32>
    %25 = vector.broadcast %24 : vector<1x128xf32> to vector<64x128xf32>
    %26 = arith.addf %23, %25 : vector<64x128xf32>
    %cst_23 = arith.constant 0.000000e+00 : f32
    %27 = vector.broadcast %cst_23 : f32 to vector<64x128xf32>
    %28 = arith.maximumf %26, %27 : vector<64x128xf32>
    %c0_24 = arith.constant 0 : index
    %c0_25 = arith.constant 0 : index
    %29 = vector.load %arg10[%c0_24, %c0_25] : memref<128x8xf32, #tpu.memory_space<vmem>>, vector<128x8xf32>
    %cst_26 = arith.constant dense<0.000000e+00> : vector<64x8xf32>
    %30 = tpu.matmul %28, %29, %cst_26 {dimension_numbers = #tpu.dot_dimension_numbers<[1], [0], [0], [1], [0, 0, 1, 1], [], []>} : vector<64x128xf32>, vector<128x8xf32>, vector<64x8xf32> -> vector<64x8xf32>
    %c0_27 = arith.constant 0 : index
    %c0_28 = arith.constant 0 : index
    %31 = vector.load %arg11[%c0_27, %c0_28] : memref<1x8xf32, #tpu.memory_space<vmem>>, vector<1x8xf32>
    %32 = vector.broadcast %31 : vector<1x8xf32> to vector<64x8xf32>
    %33 = arith.addf %30, %32 : vector<64x8xf32>
    %c0_29 = arith.constant 0 : index
    %c0_30 = arith.constant 0 : index
    %34 = vector.load %arg12[%c0_29, %c0_30] : memref<64x8xf32, #tpu.memory_space<vmem>>, vector<64x8xf32>
    tpu.vector_store %arg12[%c0_29, %c0_30], %33 {strides = array<i32>} : memref<64x8xf32, #tpu.memory_space<vmem>>, vector<64x8xf32>,
    return
  }
  func.func @transform_0(%arg0: i32) -> (i32, i32) {
    %c0_i32 = arith.constant 0 : i32
    %c0_i32_0 = arith.constant 0 : i32
    return %arg0, %c0_i32 : i32, i32
  }
  func.func @transform_1(%arg0: i32) -> (i32, i32) {
    %c0_i32 = arith.constant 0 : i32
    %c0_i32_0 = arith.constant 0 : i32
    %c0_i32_1 = arith.constant 0 : i32
    return %c0_i32, %c0_i32_0 : i32, i32
  }
  func.func @transform_2(%arg0: i32) -> (i32, i32) {
    %c0_i32 = arith.constant 0 : i32
    %c0_i32_0 = arith.constant 0 : i32
    %c0_i32_1 = arith.constant 0 : i32
    return %c0_i32, %c0_i32_0 : i32, i32
  }
  func.func @transform_3(%arg0: i32) -> (i32, i32) {
    %c0_i32 = arith.constant 0 : i32
    %c0_i32_0 = arith.constant 0 : i32
    %c0_i32_1 = arith.constant 0 : i32
    return %c0_i32, %c0_i32_0 : i32, i32
  }
  func.func @transform_4(%arg0: i32) -> (i32, i32) {
    %c0_i32 = arith.constant 0 : i32
    %c0_i32_0 = arith.constant 0 : i32
    %c0_i32_1 = arith.constant 0 : i32
    return %c0_i32, %c0_i32_0 : i32, i32
  }
  func.func @transform_5(%arg0: i32) -> (i32, i32) {
    %c0_i32 = arith.constant 0 : i32
    %c0_i32_0 = arith.constant 0 : i32
    %c0_i32_1 = arith.constant 0 : i32
    return %c0_i32, %c0_i32_0 : i32, i32
  }
  func.func @transform_6(%arg0: i32) -> (i32, i32) {
    %c0_i32 = arith.constant 0 : i32
    %c0_i32_0 = arith.constant 0 : i32
    %c0_i32_1 = arith.constant 0 : i32
    return %c0_i32, %c0_i32_0 : i32, i32
  }
  func.func @transform_7(%arg0: i32) -> (i32, i32) {
    %c0_i32 = arith.constant 0 : i32
    %c0_i32_0 = arith.constant 0 : i32
    %c0_i32_1 = arith.constant 0 : i32
    return %c0_i32, %c0_i32_0 : i32, i32
  }
  func.func @transform_8(%arg0: i32) -> (i32, i32) {
    %c0_i32 = arith.constant 0 : i32
    %c0_i32_0 = arith.constant 0 : i32
    %c0_i32_1 = arith.constant 0 : i32
    return %c0_i32, %c0_i32_0 : i32, i32
  }
  func.func @transform_9(%arg0: i32) -> (i32, i32) {
    %c0_i32 = arith.constant 0 : i32
    %c0_i32_0 = arith.constant 0 : i32
    %c0_i32_1 = arith.constant 0 : i32
    return %c0_i32, %c0_i32_0 : i32, i32
  }
  func.func @transform_10(%arg0: i32) -> (i32, i32) {
    %c0_i32 = arith.constant 0 : i32
    %c0_i32_0 = arith.constant 0 : i32
    %c0_i32_1 = arith.constant 0 : i32
    return %c0_i32, %c0_i32_0 : i32, i32
  }
  func.func @transform_11(%arg0: i32) -> (i32, i32) {
    %c0_i32 = arith.constant 0 : i32
    %c0_i32_0 = arith.constant 0 : i32
    return %arg0, %c0_i32 : i32, i32
  }
}

module attributes {stable_mosaic.version = 11 : i64} {
  func.func @_mlp_kernel(%arg0: i32, %arg1: memref<64x16xf32, #tpu.memory_space<vmem>>, %arg2: memref<16x128xf32, #tpu.memory_space<vmem>>, %arg3: memref<1x128xf32, #tpu.memory_space<vmem>>, %arg4: memref<128x128xf32, #tpu.memory_space<vmem>>, %arg5: memref<1x128xf32, #tpu.memory_space<vmem>>, %arg6: memref<128x128xf32, #tpu.memory_space<vmem>>, %arg7: memref<1x128xf32, #tpu.memory_space<vmem>>, %arg8: memref<128x128xf32, #tpu.memory_space<vmem>>, %arg9: memref<1x128xf32, #tpu.memory_space<vmem>>, %arg10: memref<128x8xf32, #tpu.memory_space<vmem>>, %arg11: memref<1x8xf32, #tpu.memory_space<vmem>>, %arg12: memref<64x8xf32, #tpu.memory_space<vmem>>) attributes {dimension_semantics = [#tpu.dimension_semantics<parallel>], iteration_bounds = array<i64: 1>, scalar_prefetch = 0 : i64, scratch_operands = 0 : i64, tpu.core_type = #tpu.core_type<tc>, window_params = [{transform_indices = @transform_0, window_bounds = array<i64: 64, 16>}, {pipeline_mode = #tpu.pipeline_mode<synchronous>, transform_indices = @transform_1, window_bounds = array<i64: 16, 128>}, {pipeline_mode = #tpu.pipeline_mode<synchronous>, transform_indices = @transform_2, window_bounds = array<i64: 1, 128>}, {pipeline_mode = #tpu.pipeline_mode<synchronous>, transform_indices = @transform_3, window_bounds = array<i64: 128, 128>}, {pipeline_mode = #tpu.pipeline_mode<synchronous>, transform_indices = @transform_4, window_bounds = array<i64: 1, 128>}, {pipeline_mode = #tpu.pipeline_mode<synchronous>, transform_indices = @transform_5, window_bounds = array<i64: 128, 128>}, {pipeline_mode = #tpu.pipeline_mode<synchronous>, transform_indices = @transform_6, window_bounds = array<i64: 1, 128>}, {pipeline_mode = #tpu.pipeline_mode<synchronous>, transform_indices = @transform_7, window_bounds = array<i64: 128, 128>}, {pipeline_mode = #tpu.pipeline_mode<synchronous>, transform_indices = @transform_8, window_bounds = array<i64: 1, 128>}, {pipeline_mode = #tpu.pipeline_mode<synchronous>, transform_indices = @transform_9, window_bounds = array<i64: 128, 8>}, {pipeline_mode = #tpu.pipeline_mode<synchronous>, transform_indices = @transform_10, window_bounds = array<i64: 1, 8>}, {transform_indices = @transform_11, window_bounds = array<i64: 64, 8>}]} {
    %c0 = arith.constant 0 : index
    %c0_0 = arith.constant 0 : index
    %0 = vector.load %arg1[%c0, %c0_0] : memref<64x16xf32, #tpu.memory_space<vmem>>, vector<64x16xf32>
    %c0_1 = arith.constant 0 : index
    %c0_2 = arith.constant 0 : index
    %1 = vector.load %arg2[%c0_1, %c0_2] : memref<16x128xf32, #tpu.memory_space<vmem>>, vector<16x128xf32>
    %cst = arith.constant dense<0.000000e+00> : vector<64x128xf32>
    %2 = tpu.matmul %0, %1, %cst {dimension_numbers = #tpu.dot_dimension_numbers<[1], [0], [0], [1], [0, 0, 1, 1], [], []>} : vector<64x16xf32>, vector<16x128xf32>, vector<64x128xf32> -> vector<64x128xf32>
    %c0_3 = arith.constant 0 : index
    %c0_4 = arith.constant 0 : index
    %3 = vector.load %arg3[%c0_3, %c0_4] : memref<1x128xf32, #tpu.memory_space<vmem>>, vector<1x128xf32>
    %4 = vector.broadcast %3 : vector<1x128xf32> to vector<64x128xf32>
    %5 = arith.addf %2, %4 : vector<64x128xf32>
    %cst_5 = arith.constant 0.000000e+00 : f32
    %6 = vector.broadcast %cst_5 : f32 to vector<64x128xf32>
    %7 = arith.maximumf %5, %6 : vector<64x128xf32>
    %c0_6 = arith.constant 0 : index
    %c0_7 = arith.constant 0 : index
    %8 = vector.load %arg4[%c0_6, %c0_7] : memref<128x128xf32, #tpu.memory_space<vmem>>, vector<128x128xf32>
    %cst_8 = arith.constant dense<0.000000e+00> : vector<64x128xf32>
    %9 = tpu.matmul %7, %8, %cst_8 {dimension_numbers = #tpu.dot_dimension_numbers<[1], [0], [0], [1], [0, 0, 1, 1], [], []>} : vector<64x128xf32>, vector<128x128xf32>, vector<64x128xf32> -> vector<64x128xf32>
    %c0_9 = arith.constant 0 : index
    %c0_10 = arith.constant 0 : index
    %10 = vector.load %arg5[%c0_9, %c0_10] : memref<1x128xf32, #tpu.memory_space<vmem>>, vector<1x128xf32>
    %11 = vector.broadcast %10 : vector<1x128xf32> to vector<64x128xf32>
    %12 = arith.addf %9, %11 : vector<64x128xf32>
    %cst_11 = arith.constant 0.000000e+00 : f32
    %13 = vector.broadcast %cst_11 : f32 to vector<64x128xf32>
    %14 = arith.maximumf %12, %13 : vector<64x128xf32>
    %c0_12 = arith.constant 0 : index
    %c0_13 = arith.constant 0 : index
    %15 = vector.load %arg6[%c0_12, %c0_13] : memref<128x128xf32, #tpu.memory_space<vmem>>, vector<128x128xf32>
    %cst_14 = arith.constant dense<0.000000e+00> : vector<64x128xf32>
    %16 = tpu.matmul %14, %15, %cst_14 {dimension_numbers = #tpu.dot_dimension_numbers<[1], [0], [0], [1], [0, 0, 1, 1], [], []>} : vector<64x128xf32>, vector<128x128xf32>, vector<64x128xf32> -> vector<64x128xf32>
    %c0_15 = arith.constant 0 : index
    %c0_16 = arith.constant 0 : index
    %17 = vector.load %arg7[%c0_15, %c0_16] : memref<1x128xf32, #tpu.memory_space<vmem>>, vector<1x128xf32>
    %18 = vector.broadcast %17 : vector<1x128xf32> to vector<64x128xf32>
    %19 = arith.addf %16, %18 : vector<64x128xf32>
    %cst_17 = arith.constant 0.000000e+00 : f32
    %20 = vector.broadcast %cst_17 : f32 to vector<64x128xf32>
    %21 = arith.maximumf %19, %20 : vector<64x128xf32>
    %c0_18 = arith.constant 0 : index
    %c0_19 = arith.constant 0 : index
    %22 = vector.load %arg8[%c0_18, %c0_19] : memref<128x128xf32, #tpu.memory_space<vmem>>, vector<128x128xf32>
    %cst_20 = arith.constant dense<0.000000e+00> : vector<64x128xf32>
    %23 = tpu.matmul %21, %22, %cst_20 {dimension_numbers = #tpu.dot_dimension_numbers<[1], [0], [0], [1], [0, 0, 1, 1], [], []>} : vector<64x128xf32>, vector<128x128xf32>, vector<64x128xf32> -> vector<64x128xf32>
    %c0_21 = arith.constant 0 : index
    %c0_22 = arith.constant 0 : index
    %24 = vector.load %arg9[%c0_21, %c0_22] : memref<1x128xf32, #tpu.memory_space<vmem>>, vector<1x128xf32>
    %25 = vector.broadcast %24 : vector<1x128xf32> to vector<64x128xf32>
    %26 = arith.addf %23, %25 : vector<64x128xf32>
    %cst_23 = arith.constant 0.000000e+00 : f32
    %27 = vector.broadcast %cst_23 : f32 to vector<64x128xf32>
    %28 = arith.maximumf %26, %27 : vector<64x128xf32>
    %c0_24 = arith.constant 0 : index
    %c0_25 = arith.constant 0 : index
    %29 = vector.load %arg10[%c0_24, %c0_25] : memref<128x8xf32, #tpu.memory_space<vmem>>, vector<128x8xf32>
    %cst_26 = arith.constant dense<0.000000e+00> : vector<64x8xf32>
    %30 = tpu.matmul %28, %29, %cst_26 {dimension_numbers = #tpu.dot_dimension_numbers<[1], [0], [0], [1], [0, 0, 1, 1], [], []>} : vector<64x128xf32>, vector<128x8xf32>, vector<64x8xf32> -> vector<64x8xf32>
    %c0_27 = arith.constant 0 : index
    %c0_28 = arith.constant 0 : index
    %31 = vector.load %arg11[%c0_27, %c0_28] : memref<1x8xf32, #tpu.memory_space<vmem>>, vector<1x8xf32>
    %32 = vector.broadcast %31 : vector<1x8xf32> to vector<64x8xf32>
    %33 = arith.addf %30, %32 : vector<64x8xf32>
    %c0_29 = arith.constant 0 : index
    %c0_30 = arith.constant 0 : index
    %34 = vector.load %arg12[%c0_29, %c0_30] : memref<64x8xf32, #tpu.memory_space<vmem>>, vector<64x8xf32>
    tpu.vector_store %arg12[%c0_29, %c0_30], %33 {strides = array<i32>} : memref<64x8xf32, #tpu.memory_space<vmem>>, vector<64x8xf32>,
    return
  }
  func.func @transform_0(%arg0: i32) -> (i32, i32) {
    %c0_i32 = arith.constant 0 : i32
    %c0_i32_0 = arith.constant 0 : i32
    return %arg0, %c0_i32 : i32, i32
  }
  func.func @transform_1(%arg0: i32) -> (i32, i32) {
    %c0_i32 = arith.constant 0 : i32
    %c0_i32_0 = arith.constant 0 : i32
    %c0_i32_1 = arith.constant 0 : i32
    return %c0_i32, %c0_i32_0 : i32, i32
  }
  func.func @transform_2(%arg0: i32) -> (i32, i32) {
    %c0_i32 = arith.constant 0 : i32
    %c0_i32_0 = arith.constant 0 : i32
    %c0_i32_1 = arith.constant 0 : i32
    return %c0_i32, %c0_i32_0 : i32, i32
  }
  func.func @transform_3(%arg0: i32) -> (i32, i32) {
    %c0_i32 = arith.constant 0 : i32
    %c0_i32_0 = arith.constant 0 : i32
    %c0_i32_1 = arith.constant 0 : i32
    return %c0_i32, %c0_i32_0 : i32, i32
  }
  func.func @transform_4(%arg0: i32) -> (i32, i32) {
    %c0_i32 = arith.constant 0 : i32
    %c0_i32_0 = arith.constant 0 : i32
    %c0_i32_1 = arith.constant 0 : i32
    return %c0_i32, %c0_i32_0 : i32, i32
  }
  func.func @transform_5(%arg0: i32) -> (i32, i32) {
    %c0_i32 = arith.constant 0 : i32
    %c0_i32_0 = arith.constant 0 : i32
    %c0_i32_1 = arith.constant 0 : i32
    return %c0_i32, %c0_i32_0 : i32, i32
  }
  func.func @transform_6(%arg0: i32) -> (i32, i32) {
    %c0_i32 = arith.constant 0 : i32
    %c0_i32_0 = arith.constant 0 : i32
    %c0_i32_1 = arith.constant 0 : i32
    return %c0_i32, %c0_i32_0 : i32, i32
  }
  func.func @transform_7(%arg0: i32) -> (i32, i32) {
    %c0_i32 = arith.constant 0 : i32
    %c0_i32_0 = arith.constant 0 : i32
    %c0_i32_1 = arith.constant 0 : i32
    return %c0_i32, %c0_i32_0 : i32, i32
  }
  func.func @transform_8(%arg0: i32) -> (i32, i32) {
    %c0_i32 = arith.constant 0 : i32
    %c0_i32_0 = arith.constant 0 : i32
    %c0_i32_1 = arith.constant 0 : i32
    return %c0_i32, %c0_i32_0 : i32, i32
  }
  func.func @transform_9(%arg0: i32) -> (i32, i32) {
    %c0_i32 = arith.constant 0 : i32
    %c0_i32_0 = arith.constant 0 : i32
    %c0_i32_1 = arith.constant 0 : i32
    return %c0_i32, %c0_i32_0 : i32, i32
  }
  func.func @transform_10(%arg0: i32) -> (i32, i32) {
    %c0_i32 = arith.constant 0 : i32
    %c0_i32_0 = arith.constant 0 : i32
    %c0_i32_1 = arith.constant 0 : i32
    return %c0_i32, %c0_i32_0 : i32, i32
  }
  func.func @transform_11(%arg0: i32) -> (i32, i32) {
    %c0_i32 = arith.constant 0 : i32
    %c0_i32_0 = arith.constant 0 : i32
    return %arg0, %c0_i32 : i32, i32
  }
}

</mosaic_0001>

<llo_original>
// kernel: _policy_forward_impl.1
$region0: #{_policy_forward_impl.1}
  #allocation0 [shape = 'u32[]', space=smem, size = 0x4, offset = 0x4, fixed_abs, tag = 'smem constant byte address 0x4 - core index']
  #allocation1 [shape = 'u32[144,128]{1,0:T(1,128)}', space=vmem, size = 0x12000, scoped, tag = 'internal scratch']
  %s0 = inlined_call_operand.vmem [shape: f32[64,16], index: 0, kind: input, shape index: {}]
  %s1 = inlined_call_operand.vmem [shape: f32[16,128], index: 1, kind: input, shape index: {}]
  %s2 = inlined_call_operand.vmem [shape: f32[1,128], index: 2, kind: input, shape index: {}]
  %s3 = inlined_call_operand.vmem [shape: f32[128,128], index: 3, kind: input, shape index: {}]
  %s4 = inlined_call_operand.vmem [shape: f32[1,128], index: 4, kind: input, shape index: {}]
  %s5 = inlined_call_operand.hbm [shape: f32[128,128], index: 5, kind: input, shape index: {}]
  %s6 = inlined_call_operand.vmem [shape: f32[1,128], index: 6, kind: input, shape index: {}]
  %s7 = inlined_call_operand.hbm [shape: f32[128,128], index: 7, kind: input, shape index: {}]
  %s8 = inlined_call_operand.vmem [shape: f32[1,128], index: 8, kind: input, shape index: {}]
  %s9 = inlined_call_operand.vmem [shape: f32[128,8], index: 9, kind: input, shape index: {}]
  %s10 = inlined_call_operand.vmem [shape: f32[1,8], index: 10, kind: input, shape index: {}]
  %s11 = inlined_call_operand.vmem [shape: f32[64,8], index: 11, kind: output, shape index: {}]
  %s12 = sld [smem:[#allocation0]]
  $region62: #{_policy_forward_impl.1} parent=0
    _
  %s14 = ssub.s32 1, %s12
  %s15 = scalar_select 0, %s14, %s12
  $region1: #{_policy_forward_impl.1} parent=0
    #allocation2 [shape = 'u8[65536]{0}', space=vmem, size = 0x10000, scoped, tag = 'input window, operand 5, single buffered']
    #allocation3 [shape = 's32[1]{0}', space=sflag, size = 0x4, scoped, tag = 'scoped memory for _policy_forward_impl.1']
    #allocation4 [shape = 'u8[65536]{0}', space=vmem, size = 0x10000, scoped, tag = 'input window, operand 7, single buffered']
    #allocation5 [shape = 's32[1]{0}', space=sflag, size = 0x4, scoped, tag = 'scoped memory for _policy_forward_impl.1']
    %16 = vsyncpa [#allocation3], 0
    %17 = vsyncpa [#allocation5], 0
    // Predicated region
    $region2: #{_policy_forward_impl.1} parent=1 // pred_check
      _
    $region3: #{_policy_forward_impl.1} parent=1 // pred_check_branch
      %19 = sbr.rel (0) target = $region5
    $region4: #{_policy_forward_impl.1} parent=1 // pred_region
      _
    $region5: #{_policy_forward_impl.1} parent=1 // pred_fallthru
      _
    // Predicated region
    $region6: #{_policy_forward_impl.1} parent=1 // pred_check
      _
    $region7: #{_policy_forward_impl.1} parent=1 // pred_check_branch
      %21 = sbr.rel (0) target = $region9
    $region8: #{_policy_forward_impl.1} parent=1 // pred_region
      _
    $region9: #{_policy_forward_impl.1} parent=1 // pred_fallthru
      _
    // Predicated region
    $region10: #{_policy_forward_impl.1} parent=1 // pred_check
      _
    $region11: #{_policy_forward_impl.1} parent=1 // pred_check_branch
      %23 = sbr.rel (0) target = $region13
    $region12: #{_policy_forward_impl.1} parent=1 // pred_region
      _
    $region13: #{_policy_forward_impl.1} parent=1 // pred_fallthru
      _
    // Predicated region
    $region14: #{_policy_forward_impl.1} parent=1 // pred_check
      _
    $region15: #{_policy_forward_impl.1} parent=1 // pred_check_branch
      %25 = sbr.rel (0) target = $region17
    $region16: #{_policy_forward_impl.1} parent=1 // pred_region
      _
    $region17: #{_policy_forward_impl.1} parent=1 // pred_fallthru
      _
    // Predicated region
    $region18: #{_policy_forward_impl.1} parent=1 // pred_check
      _
    $region19: #{_policy_forward_impl.1} parent=1 // pred_check_branch
      %27 = sbr.rel (0) target = $region21
    $region20: #{_policy_forward_impl.1} parent=1 // pred_region
      _
    $region21: #{_policy_forward_impl.1} parent=1 // pred_fallthru
      _
    // Predicated region
    $region22: #{_policy_forward_impl.1} parent=1 // pred_check
      _
    $region23: #{_policy_forward_impl.1} parent=1 // pred_check_branch
      %29 = sbr.rel (0) target = $region25
    $region24: #{_policy_forward_impl.1} parent=1 // pred_region
      %s31 = ssub.s32 2048, 2048
      %32 = vsyncadd [#allocation3], %s31
      %s33 = sshll.u32 [#allocation2], 4
      %s34 = int_to_ptr.vmem [resolvable:$true] %s33
      %39 = dma.hbm_to_vmem [thread:$0]  %s5, 2048, %s34, [#allocation3], 128, 128, 8
    $region25: #{_policy_forward_impl.1} parent=1 // pred_fallthru
      _
    // Predicated region
    $region26: #{_policy_forward_impl.1} parent=1 // pred_check
      _
    $region27: #{_policy_forward_impl.1} parent=1 // pred_check_branch
      %41 = sbr.rel (0) target = $region29
    $region28: #{_policy_forward_impl.1} parent=1 // pred_region
      _
    $region29: #{_policy_forward_impl.1} parent=1 // pred_fallthru
      _
    // Predicated region
    $region30: #{_policy_forward_impl.1} parent=1 // pred_check
      _
    $region31: #{_policy_forward_impl.1} parent=1 // pred_check_branch
      %43 = sbr.rel (0) target = $region33
    $region32: #{_policy_forward_impl.1} parent=1 // pred_region
      %s45 = ssub.s32 2048, 2048
      %46 = vsyncadd [#allocation5], %s45
      %s47 = sshll.u32 [#allocation4], 4
      %s48 = int_to_ptr.vmem [resolvable:$true] %s47
      %53 = dma.hbm_to_vmem [thread:$0]  %s7, 2048, %s48, [#allocation5], 128, 128, 8
    $region33: #{_policy_forward_impl.1} parent=1 // pred_fallthru
      _
    // Predicated region
    $region34: #{_policy_forward_impl.1} parent=1 // pred_check
      _
    $region35: #{_policy_forward_impl.1} parent=1 // pred_check_branch
      %55 = sbr.rel (0) target = $region37
    $region36: #{_policy_forward_impl.1} parent=1 // pred_region
      _
    $region37: #{_policy_forward_impl.1} parent=1 // pred_fallthru
      _
    // Predicated region
    $region38: #{_policy_forward_impl.1} parent=1 // pred_check
      _
    $region39: #{_policy_forward_impl.1} parent=1 // pred_check_branch
      %57 = sbr.rel (0) target = $region41
    $region40: #{_policy_forward_impl.1} parent=1 // pred_region
      _
    $region41: #{_policy_forward_impl.1} parent=1 // pred_fallthru
      _
    // Predicated region
    $region42: #{_policy_forward_impl.1} parent=1 // pred_check
      _
    $region43: #{_policy_forward_impl.1} parent=1 // pred_check_branch
      %59 = sbr.rel (0) target = $region45
    $region44: #{_policy_forward_impl.1} parent=1 // pred_region
      _
    $region45: #{_policy_forward_impl.1} parent=1 // pred_fallthru
      _
    // Predicated region
    $region46: #{_policy_forward_impl.1} parent=1 // pred_check
      _
    $region47: #{_policy_forward_impl.1} parent=1 // pred_check_branch
      %61 = sbr.rel (0) target = $region49
    $region48: #{_policy_forward_impl.1} parent=1 // pred_region
      %62 = dma.done [#allocation3], 2048
    $region49: #{_policy_forward_impl.1} parent=1 // pred_fallthru
      _
    // Predicated region
    $region50: #{_policy_forward_impl.1} parent=1 // pred_check
      _
    $region51: #{_policy_forward_impl.1} parent=1 // pred_check_branch
      %64 = sbr.rel (0) target = $region53
    $region52: #{_policy_forward_impl.1} parent=1 // pred_region
      %65 = dma.done [#allocation5], 2048
    $region53: #{_policy_forward_impl.1} parent=1 // pred_fallthru
      _
    %v66 = vld [vmem:[%s0] sm:$0xff]
    %v67 = vld [vmem:[%s0 + $0x8] sm:$0xff]
    %v68 = vld [vmem:[%s0 + $0x10] sm:$0xff]
    %v69 = vld [vmem:[%s0 + $0x18] sm:$0xff]
    %v70 = vld [vmem:[%s0 + $0x20] sm:$0xff]
    %v71 = vld [vmem:[%s0 + $0x28] sm:$0xff]
    %v72 = vld [vmem:[%s0 + $0x30] sm:$0xff]
    %v73 = vld [vmem:[%s0 + $0x38] sm:$0xff]
    %v74 = vld [vmem:[%s1] sm:$0xff]
    %v75 = vld [vmem:[%s1 + $0x8] sm:$0xff]
    %v76 = vld [vmem:[%s2] sm:$0x1]
    %v78 = vlaneseq
    %v79 = vshrl.u32 %v78, 7
    %v80 = vsub.s32 0, %v79
    %v81 = vrot.slane %v76, %v80
    %vm83 = vcmask 130048
    %v85 = vsel %vm83, %v66, 0
    %v88 = vsel %vm83, %v67, 0
    %v91 = vsel %vm83, %v68, 0
    %v94 = vsel %vm83, %v69, 0
    %v97 = vsel %vm83, %v70, 0
    %v100 = vsel %vm83, %v71, 0
    %v103 = vsel %vm83, %v72, 0
    %v106 = vsel %vm83, %v73, 0
    %108 = vmatprep.subr.mxu0 0.0
    %109 = vmatpush1.msra.mxu0 %v74
    %110 = vmatprep.subr.mxu0 0.0
    %111 = vmatpush1.msra.mxu0 %v75
    %112 = vmatprep.subr.mxu0 0.0
    %113 = vmatpush1.msra.mxu0 0.0
    %114 = vmatprep.subr.mxu0 0.0
    %115 = vmatpush1.msra.mxu0 0.0
    %116 = vmatprep.subr.mxu0 0.0
    %117 = vmatpush1.msra.mxu0 0.0
    %118 = vmatprep.subr.mxu0 0.0
    %119 = vmatpush1.msra.mxu0 0.0
    %120 = vmatprep.subr.mxu0 0.0
    %121 = vmatpush1.msra.mxu0 0.0
    %122 = vmatprep.subr.mxu0 0.0
    %123 = vmatpush1.msra.mxu0 0.0
    %124 = vmatprep.subr.mxu0 0.0
    %125 = vmatpush1.msra.mxu0 0.0
    %126 = vmatprep.subr.mxu0 0.0
    %127 = vmatpush1.msra.mxu0 0.0
    %128 = vmatprep.subr.mxu0 0.0
    %129 = vmatpush1.msra.mxu0 0.0
    %130 = vmatprep.subr.mxu0 0.0
    %131 = vmatpush1.msra.mxu0 0.0
    %132 = vmatprep.subr.mxu0 0.0
    %133 = vmatpush1.msra.mxu0 0.0
    %134 = vmatprep.subr.mxu0 0.0
    %135 = vmatpush1.msra.mxu0 0.0
    %136 = vmatprep.subr.mxu0 0.0
    %137 = vmatpush1.msra.mxu0 0.0
    %138 = vmatprep.subr.mxu0 0.0
    %139 = vmatpush1.msra.mxu0 0.0
    %140 = vmatprep.subr.mxu0 0.0
    %141 = vmatpush1.msra.mxu0 0.0
    %142 = vmatprep.subr.mxu0 0.0
    %143 = vmatpush1.msra.mxu0 0.0
    %144 = vmatprep.subr.mxu0 0.0
    %145 = vmatpush1.msra.mxu0 0.0
    %146 = vmatprep.subr.mxu0 0.0
    %147 = vmatpush1.msra.mxu0 0.0
    %148 = vmatprep.subr.mxu0 0.0
    %149 = vmatpush1.msra.mxu0 0.0
    %150 = vmatprep.subr.mxu0 0.0
    %151 = vmatpush1.msra.mxu0 0.0
    %152 = vmatprep.subr.mxu0 0.0
    %153 = vmatpush1.msra.mxu0 0.0
    %154 = vmatprep.subr.mxu0 0.0
    %155 = vmatpush1.msra.mxu0 0.0
    %156 = vmatprep.subr.mxu0 0.0
    %157 = vmatpush1.msra.mxu0 0.0
    %158 = vmatprep.subr.mxu0 0.0
    %159 = vmatpush1.msra.mxu0 0.0
    %160 = vmatprep.subr.mxu0 0.0
    %161 = vmatpush1.msra.mxu0 0.0
    %162 = vmatprep.subr.mxu0 0.0
    %163 = vmatpush1.msra.mxu0 0.0
    %164 = vmatprep.subr.mxu0 0.0
    %165 = vmatpush1.msra.mxu0 0.0
    %166 = vmatprep.subr.mxu0 0.0
    %167 = vmatpush1.msra.mxu0 0.0
    %168 = vmatprep.subr.mxu0 0.0
    %169 = vmatpush1.msra.mxu0 0.0
    %170 = vmatprep.subr.mxu0 0.0
    %171 = vmatpush1.msra.mxu0 0.0
    %172 = vmatprep.mubr.f32.mxu0 0.0
    %173 = vmatmul.mubr.f32.gmra.mrb[0].mxu0 %v85
    %v174 = vpop.f32.mrb[0].mxu0
    %v175 = vadd.f32 %v81, %v174
    %v176 = vpop.f32.mrb[0].mxu0
    %177 = vmatprep.mubr.f32.mxu0 0.0
    %178 = vmatmul.mubr.f32.gmra.mrb[0].mxu0 %v88
    %v179 = vpop.f32.mrb[0].mxu0
    %v180 = vadd.f32 %v81, %v179
    %v181 = vpop.f32.mrb[0].mxu0
    %182 = vmatprep.mubr.f32.mxu0 0.0
    %183 = vmatmul.mubr.f32.gmra.mrb[0].mxu0 %v91
    %v184 = vpop.f32.mrb[0].mxu0
    %v185 = vadd.f32 %v81, %v184
    %v186 = vpop.f32.mrb[0].mxu0
    %187 = vmatprep.mubr.f32.mxu0 0.0
    %188 = vmatmul.mubr.f32.gmra.mrb[0].mxu0 %v94
    %v189 = vpop.f32.mrb[0].mxu0
    %v190 = vadd.f32 %v81, %v189
    %v191 = vpop.f32.mrb[0].mxu0
    %192 = vmatprep.mubr.f32.mxu0 0.0
    %193 = vmatmul.mubr.f32.gmra.mrb[0].mxu0 %v97
    %v194 = vpop.f32.mrb[0].mxu0
    %v195 = vadd.f32 %v81, %v194
    %v196 = vpop.f32.mrb[0].mxu0
    %197 = vmatprep.mubr.f32.mxu0 0.0
    %198 = vmatmul.mubr.f32.gmra.mrb[0].mxu0 %v100
    %v199 = vpop.f32.mrb[0].mxu0
    %v200 = vadd.f32 %v81, %v199
    %v201 = vpop.f32.mrb[0].mxu0
    %202 = vmatprep.mubr.f32.mxu0 0.0
    %203 = vmatmul.mubr.f32.gmra.mrb[0].mxu0 %v103
    %v204 = vpop.f32.mrb[0].mxu0
    %v205 = vadd.f32 %v81, %v204
    %v206 = vpop.f32.mrb[0].mxu0
    %207 = vmatprep.mubr.f32.mxu0 0.0
    %208 = vmatmul.mubr.f32.gmra.mrb[0].mxu0 %v106
    %v209 = vpop.f32.mrb[0].mxu0
    %v210 = vadd.f32 %v81, %v209
    %v211 = vpop.f32.mrb[0].mxu0
    %212 = vdwg.mxu0
    %v213 = vmax.f32 %v175, 0.0
    %v214 = vmax.f32 %v180, 0.0
    %v215 = vmax.f32 %v185, 0.0
    %v216 = vmax.f32 %v190, 0.0
    %v217 = vmax.f32 %v195, 0.0
    %v218 = vmax.f32 %v200, 0.0
    %v219 = vmax.f32 %v205, 0.0
    %v220 = vmax.f32 %v210, 0.0
    %v221 = vld [vmem:[%s3] sm:$0xff]
    %v222 = vld [vmem:[%s3 + $0x8] sm:$0xff]
    %v223 = vld [vmem:[%s3 + $0x10] sm:$0xff]
    %v224 = vld [vmem:[%s3 + $0x18] sm:$0xff]
    %v225 = vld [vmem:[%s3 + $0x20] sm:$0xff]
    %v226 = vld [vmem:[%s3 + $0x28] sm:$0xff]
    %v227 = vld [vmem:[%s3 + $0x30] sm:$0xff]
    %v228 = vld [vmem:[%s3 + $0x38] sm:$0xff]
    %v229 = vld [vmem:[%s3 + $0x40] sm:$0xff]
    %v230 = vld [vmem:[%s3 + $0x48] sm:$0xff]
    %v231 = vld [vmem:[%s3 + $0x50] sm:$0xff]
    %v232 = vld [vmem:[%s3 + $0x58] sm:$0xff]
    %v233 = vld [vmem:[%s3 + $0x60] sm:$0xff]
    %v234 = vld [vmem:[%s3 + $0x68] sm:$0xff]
    %v235 = vld [vmem:[%s3 + $0x70] sm:$0xff]
    %v236 = vld [vmem:[%s3 + $0x78] sm:$0xff]
    %v237 = vld [vmem:[%s4] sm:$0x1]
    %v239 = vlaneseq
    %v240 = vshrl.u32 %v239, 7
    %v241 = vsub.s32 0, %v240
    %v242 = vrot.slane %v237, %v241
    %244 = vmatprep.subr.mxu0 0.0
    %245 = vmatpush1.msra.mxu0 %v221
    %246 = vmatprep.subr.mxu0 0.0
    %247 = vmatpush1.msra.mxu0 %v222
    %248 = vmatprep.subr.mxu0 0.0
    %249 = vmatpush1.msra.mxu0 %v223
    %250 = vmatprep.subr.mxu0 0.0
    %251 = vmatpush1.msra.mxu0 %v224
    %252 = vmatprep.subr.mxu0 0.0
    %253 = vmatpush1.msra.mxu0 %v225
    %254 = vmatprep.subr.mxu0 0.0
    %255 = vmatpush1.msra.mxu0 %v226
    %256 = vmatprep.subr.mxu0 0.0
    %257 = vmatpush1.msra.mxu0 %v227
    %258 = vmatprep.subr.mxu0 0.0
    %259 = vmatpush1.msra.mxu0 %v228
    %260 = vmatprep.subr.mxu0 0.0
    %261 = vmatpush1.msra.mxu0 %v229
    %262 = vmatprep.subr.mxu0 0.0
    %263 = vmatpush1.msra.mxu0 %v230
    %264 = vmatprep.subr.mxu0 0.0
    %265 = vmatpush1.msra.mxu0 %v231
    %266 = vmatprep.subr.mxu0 0.0
    %267 = vmatpush1.msra.mxu0 %v232
    %268 = vmatprep.subr.mxu0 0.0
    %269 = vmatpush1.msra.mxu0 %v233
    %270 = vmatprep.subr.mxu0 0.0
    %271 = vmatpush1.msra.mxu0 %v234
    %272 = vmatprep.subr.mxu0 0.0
    %273 = vmatpush1.msra.mxu0 %v235
    %274 = vmatprep.subr.mxu0 0.0
    %275 = vmatpush1.msra.mxu0 %v236
    %276 = vmatprep.subr.mxu0 0.0
    %277 = vmatpush1.msra.mxu0 0.0
    %278 = vmatprep.subr.mxu0 0.0
    %279 = vmatpush1.msra.mxu0 0.0
    %280 = vmatprep.subr.mxu0 0.0
    %281 = vmatpush1.msra.mxu0 0.0
    %282 = vmatprep.subr.mxu0 0.0
    %283 = vmatpush1.msra.mxu0 0.0
    %284 = vmatprep.subr.mxu0 0.0
    %285 = vmatpush1.msra.mxu0 0.0
    %286 = vmatprep.subr.mxu0 0.0
    %287 = vmatpush1.msra.mxu0 0.0
    %288 = vmatprep.subr.mxu0 0.0
    %289 = vmatpush1.msra.mxu0 0.0
    %290 = vmatprep.subr.mxu0 0.0
    %291 = vmatpush1.msra.mxu0 0.0
    %292 = vmatprep.subr.mxu0 0.0
    %293 = vmatpush1.msra.mxu0 0.0
    %294 = vmatprep.subr.mxu0 0.0
    %295 = vmatpush1.msra.mxu0 0.0
    %296 = vmatprep.subr.mxu0 0.0
    %297 = vmatpush1.msra.mxu0 0.0
    %298 = vmatprep.subr.mxu0 0.0
    %299 = vmatpush1.msra.mxu0 0.0
    %300 = vmatprep.subr.mxu0 0.0
    %301 = vmatpush1.msra.mxu0 0.0
    %302 = vmatprep.subr.mxu0 0.0
    %303 = vmatpush1.msra.mxu0 0.0
    %304 = vmatprep.subr.mxu0 0.0
    %305 = vmatpush1.msra.mxu0 0.0
    %306 = vmatprep.subr.mxu0 0.0
    %307 = vmatpush1.msra.mxu0 0.0
    %308 = vmatprep.mubr.f32.mxu0 0.0
    %309 = vmatmul.mubr.f32.gmra.mrb[0].mxu0 %v213
    %v310 = vpop.f32.mrb[0].mxu0
    %v311 = vadd.f32 %v242, %v310
    %v312 = vpop.f32.mrb[0].mxu0
    %313 = vmatprep.mubr.f32.mxu0 0.0
    %314 = vmatmul.mubr.f32.gmra.mrb[0].mxu0 %v214
    %v315 = vpop.f32.mrb[0].mxu0
    %v316 = vadd.f32 %v242, %v315
    %v317 = vpop.f32.mrb[0].mxu0
    %318 = vmatprep.mubr.f32.mxu0 0.0
    %319 = vmatmul.mubr.f32.gmra.mrb[0].mxu0 %v215
    %v320 = vpop.f32.mrb[0].mxu0
    %v321 = vadd.f32 %v242, %v320
    %v322 = vpop.f32.mrb[0].mxu0
    %323 = vmatprep.mubr.f32.mxu0 0.0
    %324 = vmatmul.mubr.f32.gmra.mrb[0].mxu0 %v216
    %v325 = vpop.f32.mrb[0].mxu0
    %v326 = vadd.f32 %v242, %v325
    %v327 = vpop.f32.mrb[0].mxu0
    %328 = vmatprep.mubr.f32.mxu0 0.0
    %329 = vmatmul.mubr.f32.gmra.mrb[0].mxu0 %v217
    %v330 = vpop.f32.mrb[0].mxu0
    %v331 = vadd.f32 %v242, %v330
    %v332 = vpop.f32.mrb[0].mxu0
    %333 = vmatprep.mubr.f32.mxu0 0.0
    %334 = vmatmul.mubr.f32.gmra.mrb[0].mxu0 %v218
    %v335 = vpop.f32.mrb[0].mxu0
    %v336 = vadd.f32 %v242, %v335
    %v337 = vpop.f32.mrb[0].mxu0
    %338 = vmatprep.mubr.f32.mxu0 0.0
    %339 = vmatmul.mubr.f32.gmra.mrb[0].mxu0 %v219
    %v340 = vpop.f32.mrb[0].mxu0
    %v341 = vadd.f32 %v242, %v340
    %v342 = vpop.f32.mrb[0].mxu0
    %343 = vmatprep.mubr.f32.mxu0 0.0
    %344 = vmatmul.mubr.f32.gmra.mrb[0].mxu0 %v220
    %v345 = vpop.f32.mrb[0].mxu0
    %v346 = vadd.f32 %v242, %v345
    %v347 = vpop.f32.mrb[0].mxu0
    %348 = vdwg.mxu0
    %v349 = vmax.f32 %v311, 0.0
    %v350 = vmax.f32 %v316, 0.0
    %v351 = vmax.f32 %v321, 0.0
    %v352 = vmax.f32 %v326, 0.0
    %v353 = vmax.f32 %v331, 0.0
    %v354 = vmax.f32 %v336, 0.0
    %v355 = vmax.f32 %v341, 0.0
    %v356 = vmax.f32 %v346, 0.0
    %v357 = vld [vmem:[#allocation2] sm:$0xff]
    %v358 = vld [vmem:[#allocation2 + $0x8] sm:$0xff]
    %v359 = vld [vmem:[#allocation2 + $0x10] sm:$0xff]
    %v360 = vld [vmem:[#allocation2 + $0x18] sm:$0xff]
    %v361 = vld [vmem:[#allocation2 + $0x20] sm:$0xff]
    %v362 = vld [vmem:[#allocation2 + $0x28] sm:$0xff]
    %v363 = vld [vmem:[#allocation2 + $0x30] sm:$0xff]
    %v364 = vld [vmem:[#allocation2 + $0x38] sm:$0xff]
    %v365 = vld [vmem:[#allocation2 + $0x40] sm:$0xff]
    %v366 = vld [vmem:[#allocation2 + $0x48] sm:$0xff]
    %v367 = vld [vmem:[#allocation2 + $0x50] sm:$0xff]
    %v368 = vld [vmem:[#allocation2 + $0x58] sm:$0xff]
    %v369 = vld [vmem:[#allocation2 + $0x60] sm:$0xff]
    %v370 = vld [vmem:[#allocation2 + $0x68] sm:$0xff]
    %v371 = vld [vmem:[#allocation2 + $0x70] sm:$0xff]
    %v372 = vld [vmem:[#allocation2 + $0x78] sm:$0xff]
    %v373 = vld [vmem:[%s6] sm:$0x1]
    %v375 = vlaneseq
    %v376 = vshrl.u32 %v375, 7
    %v377 = vsub.s32 0, %v376
    %v378 = vrot.slane %v373, %v377
    %380 = vmatprep.subr.mxu0 0.0
    %381 = vmatpush1.msra.mxu0 %v357
    %382 = vmatprep.subr.mxu0 0.0
    %383 = vmatpush1.msra.mxu0 %v358
    %384 = vmatprep.subr.mxu0 0.0
    %385 = vmatpush1.msra.mxu0 %v359
    %386 = vmatprep.subr.mxu0 0.0
    %387 = vmatpush1.msra.mxu0 %v360
    %388 = vmatprep.subr.mxu0 0.0
    %389 = vmatpush1.msra.mxu0 %v361
    %390 = vmatprep.subr.mxu0 0.0
    %391 = vmatpush1.msra.mxu0 %v362
    %392 = vmatprep.subr.mxu0 0.0
    %393 = vmatpush1.msra.mxu0 %v363
    %394 = vmatprep.subr.mxu0 0.0
    %395 = vmatpush1.msra.mxu0 %v364
    %396 = vmatprep.subr.mxu0 0.0
    %397 = vmatpush1.msra.mxu0 %v365
    %398 = vmatprep.subr.mxu0 0.0
    %399 = vmatpush1.msra.mxu0 %v366
    %400 = vmatprep.subr.mxu0 0.0
    %401 = vmatpush1.msra.mxu0 %v367
    %402 = vmatprep.subr.mxu0 0.0
    %403 = vmatpush1.msra.mxu0 %v368
    %404 = vmatprep.subr.mxu0 0.0
    %405 = vmatpush1.msra.mxu0 %v369
    %406 = vmatprep.subr.mxu0 0.0
    %407 = vmatpush1.msra.mxu0 %v370
    %408 = vmatprep.subr.mxu0 0.0
    %409 = vmatpush1.msra.mxu0 %v371
    %410 = vmatprep.subr.mxu0 0.0
    %411 = vmatpush1.msra.mxu0 %v372
    %412 = vmatprep.subr.mxu0 0.0
    %413 = vmatpush1.msra.mxu0 0.0
    %414 = vmatprep.subr.mxu0 0.0
    %415 = vmatpush1.msra.mxu0 0.0
    %416 = vmatprep.subr.mxu0 0.0
    %417 = vmatpush1.msra.mxu0 0.0
    %418 = vmatprep.subr.mxu0 0.0
    %419 = vmatpush1.msra.mxu0 0.0
    %420 = vmatprep.subr.mxu0 0.0
    %421 = vmatpush1.msra.mxu0 0.0
    %422 = vmatprep.subr.mxu0 0.0
    %423 = vmatpush1.msra.mxu0 0.0
    %424 = vmatprep.subr.mxu0 0.0
    %425 = vmatpush1.msra.mxu0 0.0
    %426 = vmatprep.subr.mxu0 0.0
    %427 = vmatpush1.msra.mxu0 0.0
    %428 = vmatprep.subr.mxu0 0.0
    %429 = vmatpush1.msra.mxu0 0.0
    %430 = vmatprep.subr.mxu0 0.0
    %431 = vmatpush1.msra.mxu0 0.0
    %432 = vmatprep.subr.mxu0 0.0
    %433 = vmatpush1.msra.mxu0 0.0
    %434 = vmatprep.subr.mxu0 0.0
    %435 = vmatpush1.msra.mxu0 0.0
    %436 = vmatprep.subr.mxu0 0.0
    %437 = vmatpush1.msra.mxu0 0.0
    %438 = vmatprep.subr.mxu0 0.0
    %439 = vmatpush1.msra.mxu0 0.0
    %440 = vmatprep.subr.mxu0 0.0
    %441 = vmatpush1.msra.mxu0 0.0
    %442 = vmatprep.subr.mxu0 0.0
    %443 = vmatpush1.msra.mxu0 0.0
    %444 = vmatprep.mubr.f32.mxu0 0.0
    %445 = vmatmul.mubr.f32.gmra.mrb[0].mxu0 %v349
    %v446 = vpop.f32.mrb[0].mxu0
    %v447 = vadd.f32 %v378, %v446
    %v448 = vpop.f32.mrb[0].mxu0
    %449 = vmatprep.mubr.f32.mxu0 0.0
    %450 = vmatmul.mubr.f32.gmra.mrb[0].mxu0 %v350
    %v451 = vpop.f32.mrb[0].mxu0
    %v452 = vadd.f32 %v378, %v451
    %v453 = vpop.f32.mrb[0].mxu0
    %454 = vmatprep.mubr.f32.mxu0 0.0
    %455 = vmatmul.mubr.f32.gmra.mrb[0].mxu0 %v351
    %v456 = vpop.f32.mrb[0].mxu0
    %v457 = vadd.f32 %v378, %v456
    %v458 = vpop.f32.mrb[0].mxu0
    %459 = vmatprep.mubr.f32.mxu0 0.0
    %460 = vmatmul.mubr.f32.gmra.mrb[0].mxu0 %v352
    %v461 = vpop.f32.mrb[0].mxu0
    %v462 = vadd.f32 %v378, %v461
    %v463 = vpop.f32.mrb[0].mxu0
    %464 = vmatprep.mubr.f32.mxu0 0.0
    %465 = vmatmul.mubr.f32.gmra.mrb[0].mxu0 %v353
    %v466 = vpop.f32.mrb[0].mxu0
    %v467 = vadd.f32 %v378, %v466
    %v468 = vpop.f32.mrb[0].mxu0
    %469 = vmatprep.mubr.f32.mxu0 0.0
    %470 = vmatmul.mubr.f32.gmra.mrb[0].mxu0 %v354
    %v471 = vpop.f32.mrb[0].mxu0
    %v472 = vadd.f32 %v378, %v471
    %v473 = vpop.f32.mrb[0].mxu0
    %474 = vmatprep.mubr.f32.mxu0 0.0
    %475 = vmatmul.mubr.f32.gmra.mrb[0].mxu0 %v355
    %v476 = vpop.f32.mrb[0].mxu0
    %v477 = vadd.f32 %v378, %v476
    %v478 = vpop.f32.mrb[0].mxu0
    %479 = vmatprep.mubr.f32.mxu0 0.0
    %480 = vmatmul.mubr.f32.gmra.mrb[0].mxu0 %v356
    %v481 = vpop.f32.mrb[0].mxu0
    %v482 = vadd.f32 %v378, %v481
    %v483 = vpop.f32.mrb[0].mxu0
    %484 = vdwg.mxu0
    %v485 = vmax.f32 %v447, 0.0
    %v486 = vmax.f32 %v452, 0.0
    %v487 = vmax.f32 %v457, 0.0
    %v488 = vmax.f32 %v462, 0.0
    %v489 = vmax.f32 %v467, 0.0
    %v490 = vmax.f32 %v472, 0.0
    %v491 = vmax.f32 %v477, 0.0
    %v492 = vmax.f32 %v482, 0.0
    %v493 = vld [vmem:[#allocation4] sm:$0xff]
    %v494 = vld [vmem:[#allocation4 + $0x8] sm:$0xff]
    %v495 = vld [vmem:[#allocation4 + $0x10] sm:$0xff]
    %v496 = vld [vmem:[#allocation4 + $0x18] sm:$0xff]
    %v497 = vld [vmem:[#allocation4 + $0x20] sm:$0xff]
    %v498 = vld [vmem:[#allocation4 + $0x28] sm:$0xff]
    %v499 = vld [vmem:[#allocation4 + $0x30] sm:$0xff]
    %v500 = vld [vmem:[#allocation4 + $0x38] sm:$0xff]
    %v501 = vld [vmem:[#allocation4 + $0x40] sm:$0xff]
    %v502 = vld [vmem:[#allocation4 + $0x48] sm:$0xff]
    %v503 = vld [vmem:[#allocation4 + $0x50] sm:$0xff]
    %v504 = vld [vmem:[#allocation4 + $0x58] sm:$0xff]
    %v505 = vld [vmem:[#allocation4 + $0x60] sm:$0xff]
    %v506 = vld [vmem:[#allocation4 + $0x68] sm:$0xff]
    %v507 = vld [vmem:[#allocation4 + $0x70] sm:$0xff]
    %v508 = vld [vmem:[#allocation4 + $0x78] sm:$0xff]
    %v509 = vld [vmem:[%s8] sm:$0x1]
    %v511 = vlaneseq
    %v512 = vshrl.u32 %v511, 7
    %v513 = vsub.s32 0, %v512
    %v514 = vrot.slane %v509, %v513
    %516 = vmatprep.subr.mxu0 0.0
    %517 = vmatpush1.msra.mxu0 %v493
    %518 = vmatprep.subr.mxu0 0.0
    %519 = vmatpush1.msra.mxu0 %v494
    %520 = vmatprep.subr.mxu0 0.0
    %521 = vmatpush1.msra.mxu0 %v495
    %522 = vmatprep.subr.mxu0 0.0
    %523 = vmatpush1.msra.mxu0 %v496
    %524 = vmatprep.subr.mxu0 0.0
    %525 = vmatpush1.msra.mxu0 %v497
    %526 = vmatprep.subr.mxu0 0.0
    %527 = vmatpush1.msra.mxu0 %v498
    %528 = vmatprep.subr.mxu0 0.0
    %529 = vmatpush1.msra.mxu0 %v499
    %530 = vmatprep.subr.mxu0 0.0
    %531 = vmatpush1.msra.mxu0 %v500
    %532 = vmatprep.subr.mxu0 0.0
    %533 = vmatpush1.msra.mxu0 %v501
    %534 = vmatprep.subr.mxu0 0.0
    %535 = vmatpush1.msra.mxu0 %v502
    %536 = vmatprep.subr.mxu0 0.0
    %537 = vmatpush1.msra.mxu0 %v503
    %538 = vmatprep.subr.mxu0 0.0
    %539 = vmatpush1.msra.mxu0 %v504
    %540 = vmatprep.subr.mxu0 0.0
    %541 = vmatpush1.msra.mxu0 %v505
    %542 = vmatprep.subr.mxu0 0.0
    %543 = vmatpush1.msra.mxu0 %v506
    %544 = vmatprep.subr.mxu0 0.0
    %545 = vmatpush1.msra.mxu0 %v507
    %546 = vmatprep.subr.mxu0 0.0
    %547 = vmatpush1.msra.mxu0 %v508
    %548 = vmatprep.subr.mxu0 0.0
    %549 = vmatpush1.msra.mxu0 0.0
    %550 = vmatprep.subr.mxu0 0.0
    %551 = vmatpush1.msra.mxu0 0.0
    %552 = vmatprep.subr.mxu0 0.0
    %553 = vmatpush1.msra.mxu0 0.0
    %554 = vmatprep.subr.mxu0 0.0
    %555 = vmatpush1.msra.mxu0 0.0
    %556 = vmatprep.subr.mxu0 0.0
    %557 = vmatpush1.msra.mxu0 0.0
    %558 = vmatprep.subr.mxu0 0.0
    %559 = vmatpush1.msra.mxu0 0.0
    %560 = vmatprep.subr.mxu0 0.0
    %561 = vmatpush1.msra.mxu0 0.0
    %562 = vmatprep.subr.mxu0 0.0
    %563 = vmatpush1.msra.mxu0 0.0
    %564 = vmatprep.subr.mxu0 0.0
    %565 = vmatpush1.msra.mxu0 0.0
    %566 = vmatprep.subr.mxu0 0.0
    %567 = vmatpush1.msra.mxu0 0.0
    %568 = vmatprep.subr.mxu0 0.0
    %569 = vmatpush1.msra.mxu0 0.0
    %570 = vmatprep.subr.mxu0 0.0
    %571 = vmatpush1.msra.mxu0 0.0
    %572 = vmatprep.subr.mxu0 0.0
    %573 = vmatpush1.msra.mxu0 0.0
    %574 = vmatprep.subr.mxu0 0.0
    %575 = vmatpush1.msra.mxu0 0.0
    %576 = vmatprep.subr.mxu0 0.0
    %577 = vmatpush1.msra.mxu0 0.0
    %578 = vmatprep.subr.mxu0 0.0
    %579 = vmatpush1.msra.mxu0 0.0
    %580 = vmatprep.mubr.f32.mxu0 0.0
    %581 = vmatmul.mubr.f32.gmra.mrb[0].mxu0 %v485
    %v582 = vpop.f32.mrb[0].mxu0
    %v583 = vadd.f32 %v514, %v582
    %v584 = vpop.f32.mrb[0].mxu0
    %585 = vmatprep.mubr.f32.mxu0 0.0
    %586 = vmatmul.mubr.f32.gmra.mrb[0].mxu0 %v486
    %v587 = vpop.f32.mrb[0].mxu0
    %v588 = vadd.f32 %v514, %v587
    %v589 = vpop.f32.mrb[0].mxu0
    %590 = vmatprep.mubr.f32.mxu0 0.0
    %591 = vmatmul.mubr.f32.gmra.mrb[0].mxu0 %v487
    %v592 = vpop.f32.mrb[0].mxu0
    %v593 = vadd.f32 %v514, %v592
    %v594 = vpop.f32.mrb[0].mxu0
    %595 = vmatprep.mubr.f32.mxu0 0.0
    %596 = vmatmul.mubr.f32.gmra.mrb[0].mxu0 %v488
    %v597 = vpop.f32.mrb[0].mxu0
    %v598 = vadd.f32 %v514, %v597
    %v599 = vpop.f32.mrb[0].mxu0
    %600 = vmatprep.mubr.f32.mxu0 0.0
    %601 = vmatmul.mubr.f32.gmra.mrb[0].mxu0 %v489
    %v602 = vpop.f32.mrb[0].mxu0
    %v603 = vadd.f32 %v514, %v602
    %v604 = vpop.f32.mrb[0].mxu0
    %605 = vmatprep.mubr.f32.mxu0 0.0
    %606 = vmatmul.mubr.f32.gmra.mrb[0].mxu0 %v490
    %v607 = vpop.f32.mrb[0].mxu0
    %v608 = vadd.f32 %v514, %v607
    %v609 = vpop.f32.mrb[0].mxu0
    %610 = vmatprep.mubr.f32.mxu0 0.0
    %611 = vmatmul.mubr.f32.gmra.mrb[0].mxu0 %v491
    %v612 = vpop.f32.mrb[0].mxu0
    %v613 = vadd.f32 %v514, %v612
    %v614 = vpop.f32.mrb[0].mxu0
    %615 = vmatprep.mubr.f32.mxu0 0.0
    %616 = vmatmul.mubr.f32.gmra.mrb[0].mxu0 %v492
    %v617 = vpop.f32.mrb[0].mxu0
    %v618 = vadd.f32 %v514, %v617
    %v619 = vpop.f32.mrb[0].mxu0
    %620 = vdwg.mxu0
    %v621 = vmax.f32 %v583, 0.0
    %v622 = vmax.f32 %v588, 0.0
    %v623 = vmax.f32 %v593, 0.0
    %v624 = vmax.f32 %v598, 0.0
    %v625 = vmax.f32 %v603, 0.0
    %v626 = vmax.f32 %v608, 0.0
    %v627 = vmax.f32 %v613, 0.0
    %v628 = vmax.f32 %v618, 0.0
    %v629 = vld [vmem:[%s9] sm:$0xff]
    %v630 = vld [vmem:[%s9 + $0x8] sm:$0xff]
    %v631 = vld [vmem:[%s9 + $0x10] sm:$0xff]
    %v632 = vld [vmem:[%s9 + $0x18] sm:$0xff]
    %v633 = vld [vmem:[%s9 + $0x20] sm:$0xff]
    %v634 = vld [vmem:[%s9 + $0x28] sm:$0xff]
    %v635 = vld [vmem:[%s9 + $0x30] sm:$0xff]
    %v636 = vld [vmem:[%s9 + $0x38] sm:$0xff]
    %v637 = vld [vmem:[%s9 + $0x40] sm:$0xff]
    %v638 = vld [vmem:[%s9 + $0x48] sm:$0xff]
    %v639 = vld [vmem:[%s9 + $0x50] sm:$0xff]
    %v640 = vld [vmem:[%s9 + $0x58] sm:$0xff]
    %v641 = vld [vmem:[%s9 + $0x60] sm:$0xff]
    %v642 = vld [vmem:[%s9 + $0x68] sm:$0xff]
    %v643 = vld [vmem:[%s9 + $0x70] sm:$0xff]
    %v644 = vld [vmem:[%s9 + $0x78] sm:$0xff]
    %v645 = vld [vmem:[%s10] sm:$0x1]
    %v647 = vlaneseq
    %v648 = vshrl.u32 %v647, 7
    %v649 = vsub.s32 0, %v648
    %v650 = vrot.slane %v645, %v649
    %652 = vmatprep.subr.mxu0 0.0
    %653 = vmatpush1.msra.mxu0 %v629
    %654 = vmatprep.subr.mxu0 0.0
    %655 = vmatpush1.msra.mxu0 %v630
    %656 = vmatprep.subr.mxu0 0.0
    %657 = vmatpush1.msra.mxu0 %v631
    %658 = vmatprep.subr.mxu0 0.0
    %659 = vmatpush1.msra.mxu0 %v632
    %660 = vmatprep.subr.mxu0 0.0
    %661 = vmatpush1.msra.mxu0 %v633
    %662 = vmatprep.subr.mxu0 0.0
    %663 = vmatpush1.msra.mxu0 %v634
    %664 = vmatprep.subr.mxu0 0.0
    %665 = vmatpush1.msra.mxu0 %v635
    %666 = vmatprep.subr.mxu0 0.0
    %667 = vmatpush1.msra.mxu0 %v636
    %668 = vmatprep.subr.mxu0 0.0
    %669 = vmatpush1.msra.mxu0 %v637
    %670 = vmatprep.subr.mxu0 0.0
    %671 = vmatpush1.msra.mxu0 %v638
    %672 = vmatprep.subr.mxu0 0.0
    %673 = vmatpush1.msra.mxu0 %v639
    %674 = vmatprep.subr.mxu0 0.0
    %675 = vmatpush1.msra.mxu0 %v640
    %676 = vmatprep.subr.mxu0 0.0
    %677 = vmatpush1.msra.mxu0 %v641
    %678 = vmatprep.subr.mxu0 0.0
    %679 = vmatpush1.msra.mxu0 %v642
    %680 = vmatprep.subr.mxu0 0.0
    %681 = vmatpush1.msra.mxu0 %v643
    %682 = vmatprep.subr.mxu0 0.0
    %683 = vmatpush1.msra.mxu0 %v644
    %684 = vmatprep.subr.mxu0 0.0
    %685 = vmatpush1.msra.mxu0 0.0
    %686 = vmatprep.subr.mxu0 0.0
    %687 = vmatpush1.msra.mxu0 0.0
    %688 = vmatprep.subr.mxu0 0.0
    %689 = vmatpush1.msra.mxu0 0.0
    %690 = vmatprep.subr.mxu0 0.0
    %691 = vmatpush1.msra.mxu0 0.0
    %692 = vmatprep.subr.mxu0 0.0
    %693 = vmatpush1.msra.mxu0 0.0
    %694 = vmatprep.subr.mxu0 0.0
    %695 = vmatpush1.msra.mxu0 0.0
    %696 = vmatprep.subr.mxu0 0.0
    %697 = vmatpush1.msra.mxu0 0.0
    %698 = vmatprep.subr.mxu0 0.0
    %699 = vmatpush1.msra.mxu0 0.0
    %700 = vmatprep.subr.mxu0 0.0
    %701 = vmatpush1.msra.mxu0 0.0
    %702 = vmatprep.subr.mxu0 0.0
    %703 = vmatpush1.msra.mxu0 0.0
    %704 = vmatprep.subr.mxu0 0.0
    %705 = vmatpush1.msra.mxu0 0.0
    %706 = vmatprep.subr.mxu0 0.0
    %707 = vmatpush1.msra.mxu0 0.0
    %708 = vmatprep.subr.mxu0 0.0
    %709 = vmatpush1.msra.mxu0 0.0
    %710 = vmatprep.subr.mxu0 0.0
    %711 = vmatpush1.msra.mxu0 0.0
    %712 = vmatprep.subr.mxu0 0.0
    %713 = vmatpush1.msra.mxu0 0.0
    %714 = vmatprep.subr.mxu0 0.0
    %715 = vmatpush1.msra.mxu0 0.0
    %716 = vmatprep.mubr.f32.mxu0 0.0
    %717 = vmatmul.mubr.f32.gmra.mrb[0].mxu0 %v621
    %v718 = vpop.f32.mrb[0].mxu0
    %v719 = vadd.f32 %v650, %v718
    %v720 = vpop.f32.mrb[0].mxu0
    %721 = vmatprep.mubr.f32.mxu0 0.0
    %722 = vmatmul.mubr.f32.gmra.mrb[0].mxu0 %v622
    %v723 = vpop.f32.mrb[0].mxu0
    %v724 = vadd.f32 %v650, %v723
    %v725 = vpop.f32.mrb[0].mxu0
    %726 = vmatprep.mubr.f32.mxu0 0.0
    %727 = vmatmul.mubr.f32.gmra.mrb[0].mxu0 %v623
    %v728 = vpop.f32.mrb[0].mxu0
    %v729 = vadd.f32 %v650, %v728
    %v730 = vpop.f32.mrb[0].mxu0
    %731 = vmatprep.mubr.f32.mxu0 0.0
    %732 = vmatmul.mubr.f32.gmra.mrb[0].mxu0 %v624
    %v733 = vpop.f32.mrb[0].mxu0
    %v734 = vadd.f32 %v650, %v733
    %v735 = vpop.f32.mrb[0].mxu0
    %736 = vmatprep.mubr.f32.mxu0 0.0
    %737 = vmatmul.mubr.f32.gmra.mrb[0].mxu0 %v625
    %v738 = vpop.f32.mrb[0].mxu0
    %v739 = vadd.f32 %v650, %v738
    %v740 = vpop.f32.mrb[0].mxu0
    %741 = vmatprep.mubr.f32.mxu0 0.0
    %742 = vmatmul.mubr.f32.gmra.mrb[0].mxu0 %v626
    %v743 = vpop.f32.mrb[0].mxu0
    %v744 = vadd.f32 %v650, %v743
    %v745 = vpop.f32.mrb[0].mxu0
    %746 = vmatprep.mubr.f32.mxu0 0.0
    %747 = vmatmul.mubr.f32.gmra.mrb[0].mxu0 %v627
    %v748 = vpop.f32.mrb[0].mxu0
    %v749 = vadd.f32 %v650, %v748
    %v750 = vpop.f32.mrb[0].mxu0
    %751 = vmatprep.mubr.f32.mxu0 0.0
    %752 = vmatmul.mubr.f32.gmra.mrb[0].mxu0 %v628
    %v753 = vpop.f32.mrb[0].mxu0
    %v754 = vadd.f32 %v650, %v753
    %v755 = vpop.f32.mrb[0].mxu0
    %756 = vdwg.mxu0
    %vm757 = vcmask 64512
    %758 = vst.msk [vmem:[%s11] sm:$0xff] %vm757, %v719
    %759 = vst.msk [vmem:[%s11 + $0x8] sm:$0xff] %vm757, %v724
    %760 = vst.msk [vmem:[%s11 + $0x10] sm:$0xff] %vm757, %v729
    %761 = vst.msk [vmem:[%s11 + $0x18] sm:$0xff] %vm757, %v734
    %762 = vst.msk [vmem:[%s11 + $0x20] sm:$0xff] %vm757, %v739
    %763 = vst.msk [vmem:[%s11 + $0x28] sm:$0xff] %vm757, %v744
    %764 = vst.msk [vmem:[%s11 + $0x30] sm:$0xff] %vm757, %v749
    %765 = vst.msk [vmem:[%s11 + $0x38] sm:$0xff] %vm757, %v754
    // Predicated region
    $region54: #{_policy_forward_impl.1} parent=1 // pred_check
      _
    $region55: #{_policy_forward_impl.1} parent=1 // pred_check_branch
      %767 = sbr.rel (0) target = $region57
    $region56: #{_policy_forward_impl.1} parent=1 // pred_region
      _
    $region57: #{_policy_forward_impl.1} parent=1 // pred_fallthru
      _
    // Predicated region
    $region58: #{_policy_forward_impl.1} parent=1 // pred_check
      _
    $region59: #{_policy_forward_impl.1} parent=1 // pred_check_branch
      %769 = sbr.rel (0) target = $region61
    $region60: #{_policy_forward_impl.1} parent=1 // pred_region
      _
    $region61: #{_policy_forward_impl.1} parent=1 // pred_fallthru
      _
    %770 = vsyncpa [#allocation3], 1
    %771 = vsyncpa [#allocation5], 1

// kernel: _policy_forward_impl.1
$region0: #{_policy_forward_impl.1}
  #allocation0 [shape = 'u32[]', space=smem, size = 0x4, offset = 0x4, fixed_abs, tag = 'smem constant byte address 0x4 - core index']
  #allocation1 [shape = 'u32[144,128]{1,0:T(1,128)}', space=vmem, size = 0x12000, scoped, tag = 'internal scratch']
  %s0 = inlined_call_operand.vmem [shape: f32[64,16], index: 0, kind: input, shape index: {}]
  %s1 = inlined_call_operand.vmem [shape: f32[16,128], index: 1, kind: input, shape index: {}]
  %s2 = inlined_call_operand.vmem [shape: f32[1,128], index: 2, kind: input, shape index: {}]
  %s3 = inlined_call_operand.vmem [shape: f32[128,128], index: 3, kind: input, shape index: {}]
  %s4 = inlined_call_operand.vmem [shape: f32[1,128], index: 4, kind: input, shape index: {}]
  %s5 = inlined_call_operand.hbm [shape: f32[128,128], index: 5, kind: input, shape index: {}]
  %s6 = inlined_call_operand.vmem [shape: f32[1,128], index: 6, kind: input, shape index: {}]
  %s7 = inlined_call_operand.hbm [shape: f32[128,128], index: 7, kind: input, shape index: {}]
  %s8 = inlined_call_operand.vmem [shape: f32[1,128], index: 8, kind: input, shape index: {}]
  %s9 = inlined_call_operand.vmem [shape: f32[128,8], index: 9, kind: input, shape index: {}]
  %s10 = inlined_call_operand.vmem [shape: f32[1,8], index: 10, kind: input, shape index: {}]
  %s11 = inlined_call_operand.vmem [shape: f32[64,8], index: 11, kind: output, shape index: {}]
  %s12 = sld [smem:[#allocation0]]
  $region62: #{_policy_forward_impl.1} parent=0
    _
  %s14 = ssub.s32 1, %s12
  %s15 = scalar_select 0, %s14, %s12
  $region1: #{_policy_forward_impl.1} parent=0
    #allocation2 [shape = 'u8[65536]{0}', space=vmem, size = 0x10000, scoped, tag = 'input window, operand 5, single buffered']
    #allocation3 [shape = 's32[1]{0}', space=sflag, size = 0x4, scoped, tag = 'scoped memory for _policy_forward_impl.1']
    #allocation4 [shape = 'u8[65536]{0}', space=vmem, size = 0x10000, scoped, tag = 'input window, operand 7, single buffered']
    #allocation5 [shape = 's32[1]{0}', space=sflag, size = 0x4, scoped, tag = 'scoped memory for _policy_forward_impl.1']
    %16 = vsyncpa [#allocation3], 0
    %17 = vsyncpa [#allocation5], 0
    // Predicated region
    $region2: #{_policy_forward_impl.1} parent=1 // pred_check
      _
    $region3: #{_policy_forward_impl.1} parent=1 // pred_check_branch
      %19 = sbr.rel (0) target = $region5
    $region4: #{_policy_forward_impl.1} parent=1 // pred_region
      _
    $region5: #{_policy_forward_impl.1} parent=1 // pred_fallthru
      _
    // Predicated region
    $region6: #{_policy_forward_impl.1} parent=1 // pred_check
      _
    $region7: #{_policy_forward_impl.1} parent=1 // pred_check_branch
      %21 = sbr.rel (0) target = $region9
    $region8: #{_policy_forward_impl.1} parent=1 // pred_region
      _
    $region9: #{_policy_forward_impl.1} parent=1 // pred_fallthru
      _
    // Predicated region
    $region10: #{_policy_forward_impl.1} parent=1 // pred_check
      _
    $region11: #{_policy_forward_impl.1} parent=1 // pred_check_branch
      %23 = sbr.rel (0) target = $region13
    $region12: #{_policy_forward_impl.1} parent=1 // pred_region
      _
    $region13: #{_policy_forward_impl.1} parent=1 // pred_fallthru
      _
    // Predicated region
    $region14: #{_policy_forward_impl.1} parent=1 // pred_check
      _
    $region15: #{_policy_forward_impl.1} parent=1 // pred_check_branch
      %25 = sbr.rel (0) target = $region17
    $region16: #{_policy_forward_impl.1} parent=1 // pred_region
      _
    $region17: #{_policy_forward_impl.1} parent=1 // pred_fallthru
      _
    // Predicated region
    $region18: #{_policy_forward_impl.1} parent=1 // pred_check
      _
    $region19: #{_policy_forward_impl.1} parent=1 // pred_check_branch
      %27 = sbr.rel (0) target = $region21
    $region20: #{_policy_forward_impl.1} parent=1 // pred_region
      _
    $region21: #{_policy_forward_impl.1} parent=1 // pred_fallthru
      _
    // Predicated region
    $region22: #{_policy_forward_impl.1} parent=1 // pred_check
      _
    $region23: #{_policy_forward_impl.1} parent=1 // pred_check_branch
      %29 = sbr.rel (0) target = $region25
    $region24: #{_policy_forward_impl.1} parent=1 // pred_region
      %s31 = ssub.s32 2048, 2048
      %32 = vsyncadd [#allocation3], %s31
      %s33 = sshll.u32 [#allocation2], 4
      %s34 = int_to_ptr.vmem [resolvable:$true] %s33
      %39 = dma.hbm_to_vmem [thread:$0]  %s5, 2048, %s34, [#allocation3], 128, 128, 8
    $region25: #{_policy_forward_impl.1} parent=1 // pred_fallthru
      _
    // Predicated region
    $region26: #{_policy_forward_impl.1} parent=1 // pred_check
      _
    $region27: #{_policy_forward_impl.1} parent=1 // pred_check_branch
      %41 = sbr.rel (0) target = $region29
    $region28: #{_policy_forward_impl.1} parent=1 // pred_region
      _
    $region29: #{_policy_forward_impl.1} parent=1 // pred_fallthru
      _
    // Predicated region
    $region30: #{_policy_forward_impl.1} parent=1 // pred_check
      _
    $region31: #{_policy_forward_impl.1} parent=1 // pred_check_branch
      %43 = sbr.rel (0) target = $region33
    $region32: #{_policy_forward_impl.1} parent=1 // pred_region
      %s45 = ssub.s32 2048, 2048
      %46 = vsyncadd [#allocation5], %s45
      %s47 = sshll.u32 [#allocation4], 4
      %s48 = int_to_ptr.vmem [resolvable:$true] %s47
      %53 = dma.hbm_to_vmem [thread:$0]  %s7, 2048, %s48, [#allocation5], 128, 128, 8
    $region33: #{_policy_forward_impl.1} parent=1 // pred_fallthru
      _
    // Predicated region
    $region34: #{_policy_forward_impl.1} parent=1 // pred_check
      _
    $region35: #{_policy_forward_impl.1} parent=1 // pred_check_branch
      %55 = sbr.rel (0) target = $region37
    $region36: #{_policy_forward_impl.1} parent=1 // pred_region
      _
    $region37: #{_policy_forward_impl.1} parent=1 // pred_fallthru
      _
    // Predicated region
    $region38: #{_policy_forward_impl.1} parent=1 // pred_check
      _
    $region39: #{_policy_forward_impl.1} parent=1 // pred_check_branch
      %57 = sbr.rel (0) target = $region41
    $region40: #{_policy_forward_impl.1} parent=1 // pred_region
      _
    $region41: #{_policy_forward_impl.1} parent=1 // pred_fallthru
      _
    // Predicated region
    $region42: #{_policy_forward_impl.1} parent=1 // pred_check
      _
    $region43: #{_policy_forward_impl.1} parent=1 // pred_check_branch
      %59 = sbr.rel (0) target = $region45
    $region44: #{_policy_forward_impl.1} parent=1 // pred_region
      _
    $region45: #{_policy_forward_impl.1} parent=1 // pred_fallthru
      _
    // Predicated region
    $region46: #{_policy_forward_impl.1} parent=1 // pred_check
      _
    $region47: #{_policy_forward_impl.1} parent=1 // pred_check_branch
      %61 = sbr.rel (0) target = $region49
    $region48: #{_policy_forward_impl.1} parent=1 // pred_region
      %62 = dma.done [#allocation3], 2048
    $region49: #{_policy_forward_impl.1} parent=1 // pred_fallthru
      _
    // Predicated region
    $region50: #{_policy_forward_impl.1} parent=1 // pred_check
      _
    $region51: #{_policy_forward_impl.1} parent=1 // pred_check_branch
      %64 = sbr.rel (0) target = $region53
    $region52: #{_policy_forward_impl.1} parent=1 // pred_region
      %65 = dma.done [#allocation5], 2048
    $region53: #{_policy_forward_impl.1} parent=1 // pred_fallthru
      _
    %v66 = vld [vmem:[%s0] sm:$0xff]
    %v67 = vld [vmem:[%s0 + $0x8] sm:$0xff]
    %v68 = vld [vmem:[%s0 + $0x10] sm:$0xff]
    %v69 = vld [vmem:[%s0 + $0x18] sm:$0xff]
    %v70 = vld [vmem:[%s0 + $0x20] sm:$0xff]
    %v71 = vld [vmem:[%s0 + $0x28] sm:$0xff]
    %v72 = vld [vmem:[%s0 + $0x30] sm:$0xff]
    %v73 = vld [vmem:[%s0 + $0x38] sm:$0xff]
    %v74 = vld [vmem:[%s1] sm:$0xff]
    %v75 = vld [vmem:[%s1 + $0x8] sm:$0xff]
    %v76 = vld [vmem:[%s2] sm:$0x1]
    %v78 = vlaneseq
    %v79 = vshrl.u32 %v78, 7
    %v80 = vsub.s32 0, %v79
    %v81 = vrot.slane %v76, %v80
    %vm83 = vcmask 130048
    %v85 = vsel %vm83, %v66, 0
    %v88 = vsel %vm83, %v67, 0
    %v91 = vsel %vm83, %v68, 0
    %v94 = vsel %vm83, %v69, 0
    %v97 = vsel %vm83, %v70, 0
    %v100 = vsel %vm83, %v71, 0
    %v103 = vsel %vm83, %v72, 0
    %v106 = vsel %vm83, %v73, 0
    %108 = vmatprep.subr.mxu0 0.0
    %109 = vmatpush1.msra.mxu0 %v74
    %110 = vmatprep.subr.mxu0 0.0
    %111 = vmatpush1.msra.mxu0 %v75
    %112 = vmatprep.subr.mxu0 0.0
    %113 = vmatpush1.msra.mxu0 0.0
    %114 = vmatprep.subr.mxu0 0.0
    %115 = vmatpush1.msra.mxu0 0.0
    %116 = vmatprep.subr.mxu0 0.0
    %117 = vmatpush1.msra.mxu0 0.0
    %118 = vmatprep.subr.mxu0 0.0
    %119 = vmatpush1.msra.mxu0 0.0
    %120 = vmatprep.subr.mxu0 0.0
    %121 = vmatpush1.msra.mxu0 0.0
    %122 = vmatprep.subr.mxu0 0.0
    %123 = vmatpush1.msra.mxu0 0.0
    %124 = vmatprep.subr.mxu0 0.0
    %125 = vmatpush1.msra.mxu0 0.0
    %126 = vmatprep.subr.mxu0 0.0
    %127 = vmatpush1.msra.mxu0 0.0
    %128 = vmatprep.subr.mxu0 0.0
    %129 = vmatpush1.msra.mxu0 0.0
    %130 = vmatprep.subr.mxu0 0.0
    %131 = vmatpush1.msra.mxu0 0.0
    %132 = vmatprep.subr.mxu0 0.0
    %133 = vmatpush1.msra.mxu0 0.0
    %134 = vmatprep.subr.mxu0 0.0
    %135 = vmatpush1.msra.mxu0 0.0
    %136 = vmatprep.subr.mxu0 0.0
    %137 = vmatpush1.msra.mxu0 0.0
    %138 = vmatprep.subr.mxu0 0.0
    %139 = vmatpush1.msra.mxu0 0.0
    %140 = vmatprep.subr.mxu0 0.0
    %141 = vmatpush1.msra.mxu0 0.0
    %142 = vmatprep.subr.mxu0 0.0
    %143 = vmatpush1.msra.mxu0 0.0
    %144 = vmatprep.subr.mxu0 0.0
    %145 = vmatpush1.msra.mxu0 0.0
    %146 = vmatprep.subr.mxu0 0.0
    %147 = vmatpush1.msra.mxu0 0.0
    %148 = vmatprep.subr.mxu0 0.0
    %149 = vmatpush1.msra.mxu0 0.0
    %150 = vmatprep.subr.mxu0 0.0
    %151 = vmatpush1.msra.mxu0 0.0
    %152 = vmatprep.subr.mxu0 0.0
    %153 = vmatpush1.msra.mxu0 0.0
    %154 = vmatprep.subr.mxu0 0.0
    %155 = vmatpush1.msra.mxu0 0.0
    %156 = vmatprep.subr.mxu0 0.0
    %157 = vmatpush1.msra.mxu0 0.0
    %158 = vmatprep.subr.mxu0 0.0
    %159 = vmatpush1.msra.mxu0 0.0
    %160 = vmatprep.subr.mxu0 0.0
    %161 = vmatpush1.msra.mxu0 0.0
    %162 = vmatprep.subr.mxu0 0.0
    %163 = vmatpush1.msra.mxu0 0.0
    %164 = vmatprep.subr.mxu0 0.0
    %165 = vmatpush1.msra.mxu0 0.0
    %166 = vmatprep.subr.mxu0 0.0
    %167 = vmatpush1.msra.mxu0 0.0
    %168 = vmatprep.subr.mxu0 0.0
    %169 = vmatpush1.msra.mxu0 0.0
    %170 = vmatprep.subr.mxu0 0.0
    %171 = vmatpush1.msra.mxu0 0.0
    %172 = vmatprep.mubr.f32.mxu0 0.0
    %173 = vmatmul.mubr.f32.gmra.mrb[0].mxu0 %v85
    %v174 = vpop.f32.mrb[0].mxu0
    %v175 = vadd.f32 %v81, %v174
    %v176 = vpop.f32.mrb[0].mxu0
    %177 = vmatprep.mubr.f32.mxu0 0.0
    %178 = vmatmul.mubr.f32.gmra.mrb[0].mxu0 %v88
    %v179 = vpop.f32.mrb[0].mxu0
    %v180 = vadd.f32 %v81, %v179
    %v181 = vpop.f32.mrb[0].mxu0
    %182 = vmatprep.mubr.f32.mxu0 0.0
    %183 = vmatmul.mubr.f32.gmra.mrb[0].mxu0 %v91
    %v184 = vpop.f32.mrb[0].mxu0
    %v185 = vadd.f32 %v81, %v184
    %v186 = vpop.f32.mrb[0].mxu0
    %187 = vmatprep.mubr.f32.mxu0 0.0
    %188 = vmatmul.mubr.f32.gmra.mrb[0].mxu0 %v94
    %v189 = vpop.f32.mrb[0].mxu0
    %v190 = vadd.f32 %v81, %v189
    %v191 = vpop.f32.mrb[0].mxu0
    %192 = vmatprep.mubr.f32.mxu0 0.0
    %193 = vmatmul.mubr.f32.gmra.mrb[0].mxu0 %v97
    %v194 = vpop.f32.mrb[0].mxu0
    %v195 = vadd.f32 %v81, %v194
    %v196 = vpop.f32.mrb[0].mxu0
    %197 = vmatprep.mubr.f32.mxu0 0.0
    %198 = vmatmul.mubr.f32.gmra.mrb[0].mxu0 %v100
    %v199 = vpop.f32.mrb[0].mxu0
    %v200 = vadd.f32 %v81, %v199
    %v201 = vpop.f32.mrb[0].mxu0
    %202 = vmatprep.mubr.f32.mxu0 0.0
    %203 = vmatmul.mubr.f32.gmra.mrb[0].mxu0 %v103
    %v204 = vpop.f32.mrb[0].mxu0
    %v205 = vadd.f32 %v81, %v204
    %v206 = vpop.f32.mrb[0].mxu0
    %207 = vmatprep.mubr.f32.mxu0 0.0
    %208 = vmatmul.mubr.f32.gmra.mrb[0].mxu0 %v106
    %v209 = vpop.f32.mrb[0].mxu0
    %v210 = vadd.f32 %v81, %v209
    %v211 = vpop.f32.mrb[0].mxu0
    %212 = vdwg.mxu0
    %v213 = vmax.f32 %v175, 0.0
    %v214 = vmax.f32 %v180, 0.0
    %v215 = vmax.f32 %v185, 0.0
    %v216 = vmax.f32 %v190, 0.0
    %v217 = vmax.f32 %v195, 0.0
    %v218 = vmax.f32 %v200, 0.0
    %v219 = vmax.f32 %v205, 0.0
    %v220 = vmax.f32 %v210, 0.0
    %v221 = vld [vmem:[%s3] sm:$0xff]
    %v222 = vld [vmem:[%s3 + $0x8] sm:$0xff]
    %v223 = vld [vmem:[%s3 + $0x10] sm:$0xff]
    %v224 = vld [vmem:[%s3 + $0x18] sm:$0xff]
    %v225 = vld [vmem:[%s3 + $0x20] sm:$0xff]
    %v226 = vld [vmem:[%s3 + $0x28] sm:$0xff]
    %v227 = vld [vmem:[%s3 + $0x30] sm:$0xff]
    %v228 = vld [vmem:[%s3 + $0x38] sm:$0xff]
    %v229 = vld [vmem:[%s3 + $0x40] sm:$0xff]
    %v230 = vld [vmem:[%s3 + $0x48] sm:$0xff]
    %v231 = vld [vmem:[%s3 + $0x50] sm:$0xff]
    %v232 = vld [vmem:[%s3 + $0x58] sm:$0xff]
    %v233 = vld [vmem:[%s3 + $0x60] sm:$0xff]
    %v234 = vld [vmem:[%s3 + $0x68] sm:$0xff]
    %v235 = vld [vmem:[%s3 + $0x70] sm:$0xff]
    %v236 = vld [vmem:[%s3 + $0x78] sm:$0xff]
    %v237 = vld [vmem:[%s4] sm:$0x1]
    %v239 = vlaneseq
    %v240 = vshrl.u32 %v239, 7
    %v241 = vsub.s32 0, %v240
    %v242 = vrot.slane %v237, %v241
    %244 = vmatprep.subr.mxu0 0.0
    %245 = vmatpush1.msra.mxu0 %v221
    %246 = vmatprep.subr.mxu0 0.0
    %247 = vmatpush1.msra.mxu0 %v222
    %248 = vmatprep.subr.mxu0 0.0
    %249 = vmatpush1.msra.mxu0 %v223
    %250 = vmatprep.subr.mxu0 0.0
    %251 = vmatpush1.msra.mxu0 %v224
    %252 = vmatprep.subr.mxu0 0.0
    %253 = vmatpush1.msra.mxu0 %v225
    %254 = vmatprep.subr.mxu0 0.0
    %255 = vmatpush1.msra.mxu0 %v226
    %256 = vmatprep.subr.mxu0 0.0
    %257 = vmatpush1.msra.mxu0 %v227
    %258 = vmatprep.subr.mxu0 0.0
    %259 = vmatpush1.msra.mxu0 %v228
    %260 = vmatprep.subr.mxu0 0.0
    %261 = vmatpush1.msra.mxu0 %v229
    %262 = vmatprep.subr.mxu0 0.0
    %263 = vmatpush1.msra.mxu0 %v230
    %264 = vmatprep.subr.mxu0 0.0
    %265 = vmatpush1.msra.mxu0 %v231
    %266 = vmatprep.subr.mxu0 0.0
    %267 = vmatpush1.msra.mxu0 %v232
    %268 = vmatprep.subr.mxu0 0.0
    %269 = vmatpush1.msra.mxu0 %v233
    %270 = vmatprep.subr.mxu0 0.0
    %271 = vmatpush1.msra.mxu0 %v234
    %272 = vmatprep.subr.mxu0 0.0
    %273 = vmatpush1.msra.mxu0 %v235
    %274 = vmatprep.subr.mxu0 0.0
    %275 = vmatpush1.msra.mxu0 %v236
    %276 = vmatprep.subr.mxu0 0.0
    %277 = vmatpush1.msra.mxu0 0.0
    %278 = vmatprep.subr.mxu0 0.0
    %279 = vmatpush1.msra.mxu0 0.0
    %280 = vmatprep.subr.mxu0 0.0
    %281 = vmatpush1.msra.mxu0 0.0
    %282 = vmatprep.subr.mxu0 0.0
    %283 = vmatpush1.msra.mxu0 0.0
    %284 = vmatprep.subr.mxu0 0.0
    %285 = vmatpush1.msra.mxu0 0.0
    %286 = vmatprep.subr.mxu0 0.0
    %287 = vmatpush1.msra.mxu0 0.0
    %288 = vmatprep.subr.mxu0 0.0
    %289 = vmatpush1.msra.mxu0 0.0
    %290 = vmatprep.subr.mxu0 0.0
    %291 = vmatpush1.msra.mxu0 0.0
    %292 = vmatprep.subr.mxu0 0.0
    %293 = vmatpush1.msra.mxu0 0.0
    %294 = vmatprep.subr.mxu0 0.0
    %295 = vmatpush1.msra.mxu0 0.0
    %296 = vmatprep.subr.mxu0 0.0
    %297 = vmatpush1.msra.mxu0 0.0
    %298 = vmatprep.subr.mxu0 0.0
    %299 = vmatpush1.msra.mxu0 0.0
    %300 = vmatprep.subr.mxu0 0.0
    %301 = vmatpush1.msra.mxu0 0.0
    %302 = vmatprep.subr.mxu0 0.0
    %303 = vmatpush1.msra.mxu0 0.0
    %304 = vmatprep.subr.mxu0 0.0
    %305 = vmatpush1.msra.mxu0 0.0
    %306 = vmatprep.subr.mxu0 0.0
    %307 = vmatpush1.msra.mxu0 0.0
    %308 = vmatprep.mubr.f32.mxu0 0.0
    %309 = vmatmul.mubr.f32.gmra.mrb[0].mxu0 %v213
    %v310 = vpop.f32.mrb[0].mxu0
    %v311 = vadd.f32 %v242, %v310
    %v312 = vpop.f32.mrb[0].mxu0
    %313 = vmatprep.mubr.f32.mxu0 0.0
    %314 = vmatmul.mubr.f32.gmra.mrb[0].mxu0 %v214
    %v315 = vpop.f32.mrb[0].mxu0
    %v316 = vadd.f32 %v242, %v315
    %v317 = vpop.f32.mrb[0].mxu0
    %318 = vmatprep.mubr.f32.mxu0 0.0
    %319 = vmatmul.mubr.f32.gmra.mrb[0].mxu0 %v215
    %v320 = vpop.f32.mrb[0].mxu0
    %v321 = vadd.f32 %v242, %v320
    %v322 = vpop.f32.mrb[0].mxu0
    %323 = vmatprep.mubr.f32.mxu0 0.0
    %324 = vmatmul.mubr.f32.gmra.mrb[0].mxu0 %v216
    %v325 = vpop.f32.mrb[0].mxu0
    %v326 = vadd.f32 %v242, %v325
    %v327 = vpop.f32.mrb[0].mxu0
    %328 = vmatprep.mubr.f32.mxu0 0.0
    %329 = vmatmul.mubr.f32.gmra.mrb[0].mxu0 %v217
    %v330 = vpop.f32.mrb[0].mxu0
    %v331 = vadd.f32 %v242, %v330
    %v332 = vpop.f32.mrb[0].mxu0
    %333 = vmatprep.mubr.f32.mxu0 0.0
    %334 = vmatmul.mubr.f32.gmra.mrb[0].mxu0 %v218
    %v335 = vpop.f32.mrb[0].mxu0
    %v336 = vadd.f32 %v242, %v335
    %v337 = vpop.f32.mrb[0].mxu0
    %338 = vmatprep.mubr.f32.mxu0 0.0
    %339 = vmatmul.mubr.f32.gmra.mrb[0].mxu0 %v219
    %v340 = vpop.f32.mrb[0].mxu0
    %v341 = vadd.f32 %v242, %v340
    %v342 = vpop.f32.mrb[0].mxu0
    %343 = vmatprep.mubr.f32.mxu0 0.0
    %344 = vmatmul.mubr.f32.gmra.mrb[0].mxu0 %v220
    %v345 = vpop.f32.mrb[0].mxu0
    %v346 = vadd.f32 %v242, %v345
    %v347 = vpop.f32.mrb[0].mxu0
    %348 = vdwg.mxu0
    %v349 = vmax.f32 %v311, 0.0
    %v350 = vmax.f32 %v316, 0.0
    %v351 = vmax.f32 %v321, 0.0
    %v352 = vmax.f32 %v326, 0.0
    %v353 = vmax.f32 %v331, 0.0
    %v354 = vmax.f32 %v336, 0.0
    %v355 = vmax.f32 %v341, 0.0
    %v356 = vmax.f32 %v346, 0.0
    %v357 = vld [vmem:[#allocation2] sm:$0xff]
    %v358 = vld [vmem:[#allocation2 + $0x8] sm:$0xff]
    %v359 = vld [vmem:[#allocation2 + $0x10] sm:$0xff]
    %v360 = vld [vmem:[#allocation2 + $0x18] sm:$0xff]
    %v361 = vld [vmem:[#allocation2 + $0x20] sm:$0xff]
    %v362 = vld [vmem:[#allocation2 + $0x28] sm:$0xff]
    %v363 = vld [vmem:[#allocation2 + $0x30] sm:$0xff]
    %v364 = vld [vmem:[#allocation2 + $0x38] sm:$0xff]
    %v365 = vld [vmem:[#allocation2 + $0x40] sm:$0xff]
    %v366 = vld [vmem:[#allocation2 + $0x48] sm:$0xff]
    %v367 = vld [vmem:[#allocation2 + $0x50] sm:$0xff]
    %v368 = vld [vmem:[#allocation2 + $0x58] sm:$0xff]
    %v369 = vld [vmem:[#allocation2 + $0x60] sm:$0xff]
    %v370 = vld [vmem:[#allocation2 + $0x68] sm:$0xff]
    %v371 = vld [vmem:[#allocation2 + $0x70] sm:$0xff]
    %v372 = vld [vmem:[#allocation2 + $0x78] sm:$0xff]
    %v373 = vld [vmem:[%s6] sm:$0x1]
    %v375 = vlaneseq
    %v376 = vshrl.u32 %v375, 7
    %v377 = vsub.s32 0, %v376
    %v378 = vrot.slane %v373, %v377
    %380 = vmatprep.subr.mxu0 0.0
    %381 = vmatpush1.msra.mxu0 %v357
    %382 = vmatprep.subr.mxu0 0.0
    %383 = vmatpush1.msra.mxu0 %v358
    %384 = vmatprep.subr.mxu0 0.0
    %385 = vmatpush1.msra.mxu0 %v359
    %386 = vmatprep.subr.mxu0 0.0
    %387 = vmatpush1.msra.mxu0 %v360
    %388 = vmatprep.subr.mxu0 0.0
    %389 = vmatpush1.msra.mxu0 %v361
    %390 = vmatprep.subr.mxu0 0.0
    %391 = vmatpush1.msra.mxu0 %v362
    %392 = vmatprep.subr.mxu0 0.0
    %393 = vmatpush1.msra.mxu0 %v363
    %394 = vmatprep.subr.mxu0 0.0
    %395 = vmatpush1.msra.mxu0 %v364
    %396 = vmatprep.subr.mxu0 0.0
    %397 = vmatpush1.msra.mxu0 %v365
    %398 = vmatprep.subr.mxu0 0.0
    %399 = vmatpush1.msra.mxu0 %v366
    %400 = vmatprep.subr.mxu0 0.0
    %401 = vmatpush1.msra.mxu0 %v367
    %402 = vmatprep.subr.mxu0 0.0
    %403 = vmatpush1.msra.mxu0 %v368
    %404 = vmatprep.subr.mxu0 0.0
    %405 = vmatpush1.msra.mxu0 %v369
    %406 = vmatprep.subr.mxu0 0.0
    %407 = vmatpush1.msra.mxu0 %v370
    %408 = vmatprep.subr.mxu0 0.0
    %409 = vmatpush1.msra.mxu0 %v371
    %410 = vmatprep.subr.mxu0 0.0
    %411 = vmatpush1.msra.mxu0 %v372
    %412 = vmatprep.subr.mxu0 0.0
    %413 = vmatpush1.msra.mxu0 0.0
    %414 = vmatprep.subr.mxu0 0.0
    %415 = vmatpush1.msra.mxu0 0.0
    %416 = vmatprep.subr.mxu0 0.0
    %417 = vmatpush1.msra.mxu0 0.0
    %418 = vmatprep.subr.mxu0 0.0
    %419 = vmatpush1.msra.mxu0 0.0
    %420 = vmatprep.subr.mxu0 0.0
    %421 = vmatpush1.msra.mxu0 0.0
    %422 = vmatprep.subr.mxu0 0.0
    %423 = vmatpush1.msra.mxu0 0.0
    %424 = vmatprep.subr.mxu0 0.0
    %425 = vmatpush1.msra.mxu0 0.0
    %426 = vmatprep.subr.mxu0 0.0
    %427 = vmatpush1.msra.mxu0 0.0
    %428 = vmatprep.subr.mxu0 0.0
    %429 = vmatpush1.msra.mxu0 0.0
    %430 = vmatprep.subr.mxu0 0.0
    %431 = vmatpush1.msra.mxu0 0.0
    %432 = vmatprep.subr.mxu0 0.0
    %433 = vmatpush1.msra.mxu0 0.0
    %434 = vmatprep.subr.mxu0 0.0
    %435 = vmatpush1.msra.mxu0 0.0
    %436 = vmatprep.subr.mxu0 0.0
    %437 = vmatpush1.msra.mxu0 0.0
    %438 = vmatprep.subr.mxu0 0.0
    %439 = vmatpush1.msra.mxu0 0.0
    %440 = vmatprep.subr.mxu0 0.0
    %441 = vmatpush1.msra.mxu0 0.0
    %442 = vmatprep.subr.mxu0 0.0
    %443 = vmatpush1.msra.mxu0 0.0
    %444 = vmatprep.mubr.f32.mxu0 0.0
    %445 = vmatmul.mubr.f32.gmra.mrb[0].mxu0 %v349
    %v446 = vpop.f32.mrb[0].mxu0
    %v447 = vadd.f32 %v378, %v446
    %v448 = vpop.f32.mrb[0].mxu0
    %449 = vmatprep.mubr.f32.mxu0 0.0
    %450 = vmatmul.mubr.f32.gmra.mrb[0].mxu0 %v350
    %v451 = vpop.f32.mrb[0].mxu0
    %v452 = vadd.f32 %v378, %v451
    %v453 = vpop.f32.mrb[0].mxu0
    %454 = vmatprep.mubr.f32.mxu0 0.0
    %455 = vmatmul.mubr.f32.gmra.mrb[0].mxu0 %v351
    %v456 = vpop.f32.mrb[0].mxu0
    %v457 = vadd.f32 %v378, %v456
    %v458 = vpop.f32.mrb[0].mxu0
    %459 = vmatprep.mubr.f32.mxu0 0.0
    %460 = vmatmul.mubr.f32.gmra.mrb[0].mxu0 %v352
    %v461 = vpop.f32.mrb[0].mxu0
    %v462 = vadd.f32 %v378, %v461
    %v463 = vpop.f32.mrb[0].mxu0
    %464 = vmatprep.mubr.f32.mxu0 0.0
    %465 = vmatmul.mubr.f32.gmra.mrb[0].mxu0 %v353
    %v466 = vpop.f32.mrb[0].mxu0
    %v467 = vadd.f32 %v378, %v466
    %v468 = vpop.f32.mrb[0].mxu0
    %469 = vmatprep.mubr.f32.mxu0 0.0
    %470 = vmatmul.mubr.f32.gmra.mrb[0].mxu0 %v354
    %v471 = vpop.f32.mrb[0].mxu0
    %v472 = vadd.f32 %v378, %v471
    %v473 = vpop.f32.mrb[0].mxu0
    %474 = vmatprep.mubr.f32.mxu0 0.0
    %475 = vmatmul.mubr.f32.gmra.mrb[0].mxu0 %v355
    %v476 = vpop.f32.mrb[0].mxu0
    %v477 = vadd.f32 %v378, %v476
    %v478 = vpop.f32.mrb[0].mxu0
    %479 = vmatprep.mubr.f32.mxu0 0.0
    %480 = vmatmul.mubr.f32.gmra.mrb[0].mxu0 %v356
    %v481 = vpop.f32.mrb[0].mxu0
    %v482 = vadd.f32 %v378, %v481
    %v483 = vpop.f32.mrb[0].mxu0
    %484 = vdwg.mxu0
    %v485 = vmax.f32 %v447, 0.0
    %v486 = vmax.f32 %v452, 0.0
    %v487 = vmax.f32 %v457, 0.0
    %v488 = vmax.f32 %v462, 0.0
    %v489 = vmax.f32 %v467, 0.0
    %v490 = vmax.f32 %v472, 0.0
    %v491 = vmax.f32 %v477, 0.0
    %v492 = vmax.f32 %v482, 0.0
    %v493 = vld [vmem:[#allocation4] sm:$0xff]
    %v494 = vld [vmem:[#allocation4 + $0x8] sm:$0xff]
    %v495 = vld [vmem:[#allocation4 + $0x10] sm:$0xff]
    %v496 = vld [vmem:[#allocation4 + $0x18] sm:$0xff]
    %v497 = vld [vmem:[#allocation4 + $0x20] sm:$0xff]
    %v498 = vld [vmem:[#allocation4 + $0x28] sm:$0xff]
    %v499 = vld [vmem:[#allocation4 + $0x30] sm:$0xff]
    %v500 = vld [vmem:[#allocation4 + $0x38] sm:$0xff]
    %v501 = vld [vmem:[#allocation4 + $0x40] sm:$0xff]
    %v502 = vld [vmem:[#allocation4 + $0x48] sm:$0xff]
    %v503 = vld [vmem:[#allocation4 + $0x50] sm:$0xff]
    %v504 = vld [vmem:[#allocation4 + $0x58] sm:$0xff]
    %v505 = vld [vmem:[#allocation4 + $0x60] sm:$0xff]
    %v506 = vld [vmem:[#allocation4 + $0x68] sm:$0xff]
    %v507 = vld [vmem:[#allocation4 + $0x70] sm:$0xff]
    %v508 = vld [vmem:[#allocation4 + $0x78] sm:$0xff]
    %v509 = vld [vmem:[%s8] sm:$0x1]
    %v511 = vlaneseq
    %v512 = vshrl.u32 %v511, 7
    %v513 = vsub.s32 0, %v512
    %v514 = vrot.slane %v509, %v513
    %516 = vmatprep.subr.mxu0 0.0
    %517 = vmatpush1.msra.mxu0 %v493
    %518 = vmatprep.subr.mxu0 0.0
    %519 = vmatpush1.msra.mxu0 %v494
    %520 = vmatprep.subr.mxu0 0.0
    %521 = vmatpush1.msra.mxu0 %v495
    %522 = vmatprep.subr.mxu0 0.0
    %523 = vmatpush1.msra.mxu0 %v496
    %524 = vmatprep.subr.mxu0 0.0
    %525 = vmatpush1.msra.mxu0 %v497
    %526 = vmatprep.subr.mxu0 0.0
    %527 = vmatpush1.msra.mxu0 %v498
    %528 = vmatprep.subr.mxu0 0.0
    %529 = vmatpush1.msra.mxu0 %v499
    %530 = vmatprep.subr.mxu0 0.0
    %531 = vmatpush1.msra.mxu0 %v500
    %532 = vmatprep.subr.mxu0 0.0
    %533 = vmatpush1.msra.mxu0 %v501
    %534 = vmatprep.subr.mxu0 0.0
    %535 = vmatpush1.msra.mxu0 %v502
    %536 = vmatprep.subr.mxu0 0.0
    %537 = vmatpush1.msra.mxu0 %v503
    %538 = vmatprep.subr.mxu0 0.0
    %539 = vmatpush1.msra.mxu0 %v504
    %540 = vmatprep.subr.mxu0 0.0
    %541 = vmatpush1.msra.mxu0 %v505
    %542 = vmatprep.subr.mxu0 0.0
    %543 = vmatpush1.msra.mxu0 %v506
    %544 = vmatprep.subr.mxu0 0.0
    %545 = vmatpush1.msra.mxu0 %v507
    %546 = vmatprep.subr.mxu0 0.0
    %547 = vmatpush1.msra.mxu0 %v508
    %548 = vmatprep.subr.mxu0 0.0
    %549 = vmatpush1.msra.mxu0 0.0
    %550 = vmatprep.subr.mxu0 0.0
    %551 = vmatpush1.msra.mxu0 0.0
    %552 = vmatprep.subr.mxu0 0.0
    %553 = vmatpush1.msra.mxu0 0.0
    %554 = vmatprep.subr.mxu0 0.0
    %555 = vmatpush1.msra.mxu0 0.0
    %556 = vmatprep.subr.mxu0 0.0
    %557 = vmatpush1.msra.mxu0 0.0
    %558 = vmatprep.subr.mxu0 0.0
    %559 = vmatpush1.msra.mxu0 0.0
    %560 = vmatprep.subr.mxu0 0.0
    %561 = vmatpush1.msra.mxu0 0.0
    %562 = vmatprep.subr.mxu0 0.0
    %563 = vmatpush1.msra.mxu0 0.0
    %564 = vmatprep.subr.mxu0 0.0
    %565 = vmatpush1.msra.mxu0 0.0
    %566 = vmatprep.subr.mxu0 0.0
    %567 = vmatpush1.msra.mxu0 0.0
    %568 = vmatprep.subr.mxu0 0.0
    %569 = vmatpush1.msra.mxu0 0.0
    %570 = vmatprep.subr.mxu0 0.0
    %571 = vmatpush1.msra.mxu0 0.0
    %572 = vmatprep.subr.mxu0 0.0
    %573 = vmatpush1.msra.mxu0 0.0
    %574 = vmatprep.subr.mxu0 0.0
    %575 = vmatpush1.msra.mxu0 0.0
    %576 = vmatprep.subr.mxu0 0.0
    %577 = vmatpush1.msra.mxu0 0.0
    %578 = vmatprep.subr.mxu0 0.0
    %579 = vmatpush1.msra.mxu0 0.0
    %580 = vmatprep.mubr.f32.mxu0 0.0
    %581 = vmatmul.mubr.f32.gmra.mrb[0].mxu0 %v485
    %v582 = vpop.f32.mrb[0].mxu0
    %v583 = vadd.f32 %v514, %v582
    %v584 = vpop.f32.mrb[0].mxu0
    %585 = vmatprep.mubr.f32.mxu0 0.0
    %586 = vmatmul.mubr.f32.gmra.mrb[0].mxu0 %v486
    %v587 = vpop.f32.mrb[0].mxu0
    %v588 = vadd.f32 %v514, %v587
    %v589 = vpop.f32.mrb[0].mxu0
    %590 = vmatprep.mubr.f32.mxu0 0.0
    %591 = vmatmul.mubr.f32.gmra.mrb[0].mxu0 %v487
    %v592 = vpop.f32.mrb[0].mxu0
    %v593 = vadd.f32 %v514, %v592
    %v594 = vpop.f32.mrb[0].mxu0
    %595 = vmatprep.mubr.f32.mxu0 0.0
    %596 = vmatmul.mubr.f32.gmra.mrb[0].mxu0 %v488
    %v597 = vpop.f32.mrb[0].mxu0
    %v598 = vadd.f32 %v514, %v597
    %v599 = vpop.f32.mrb[0].mxu0
    %600 = vmatprep.mubr.f32.mxu0 0.0
    %601 = vmatmul.mubr.f32.gmra.mrb[0].mxu0 %v489
    %v602 = vpop.f32.mrb[0].mxu0
    %v603 = vadd.f32 %v514, %v602
    %v604 = vpop.f32.mrb[0].mxu0
    %605 = vmatprep.mubr.f32.mxu0 0.0
    %606 = vmatmul.mubr.f32.gmra.mrb[0].mxu0 %v490
    %v607 = vpop.f32.mrb[0].mxu0
    %v608 = vadd.f32 %v514, %v607
    %v609 = vpop.f32.mrb[0].mxu0
    %610 = vmatprep.mubr.f32.mxu0 0.0
    %611 = vmatmul.mubr.f32.gmra.mrb[0].mxu0 %v491
    %v612 = vpop.f32.mrb[0].mxu0
    %v613 = vadd.f32 %v514, %v612
    %v614 = vpop.f32.mrb[0].mxu0
    %615 = vmatprep.mubr.f32.mxu0 0.0
    %616 = vmatmul.mubr.f32.gmra.mrb[0].mxu0 %v492
    %v617 = vpop.f32.mrb[0].mxu0
    %v618 = vadd.f32 %v514, %v617
    %v619 = vpop.f32.mrb[0].mxu0
    %620 = vdwg.mxu0
    %v621 = vmax.f32 %v583, 0.0
    %v622 = vmax.f32 %v588, 0.0
    %v623 = vmax.f32 %v593, 0.0
    %v624 = vmax.f32 %v598, 0.0
    %v625 = vmax.f32 %v603, 0.0
    %v626 = vmax.f32 %v608, 0.0
    %v627 = vmax.f32 %v613, 0.0
    %v628 = vmax.f32 %v618, 0.0
    %v629 = vld [vmem:[%s9] sm:$0xff]
    %v630 = vld [vmem:[%s9 + $0x8] sm:$0xff]
    %v631 = vld [vmem:[%s9 + $0x10] sm:$0xff]
    %v632 = vld [vmem:[%s9 + $0x18] sm:$0xff]
    %v633 = vld [vmem:[%s9 + $0x20] sm:$0xff]
    %v634 = vld [vmem:[%s9 + $0x28] sm:$0xff]
    %v635 = vld [vmem:[%s9 + $0x30] sm:$0xff]
    %v636 = vld [vmem:[%s9 + $0x38] sm:$0xff]
    %v637 = vld [vmem:[%s9 + $0x40] sm:$0xff]
    %v638 = vld [vmem:[%s9 + $0x48] sm:$0xff]
    %v639 = vld [vmem:[%s9 + $0x50] sm:$0xff]
    %v640 = vld [vmem:[%s9 + $0x58] sm:$0xff]
    %v641 = vld [vmem:[%s9 + $0x60] sm:$0xff]
    %v642 = vld [vmem:[%s9 + $0x68] sm:$0xff]
    %v643 = vld [vmem:[%s9 + $0x70] sm:$0xff]
    %v644 = vld [vmem:[%s9 + $0x78] sm:$0xff]
    %v645 = vld [vmem:[%s10] sm:$0x1]
    %v647 = vlaneseq
    %v648 = vshrl.u32 %v647, 7
    %v649 = vsub.s32 0, %v648
    %v650 = vrot.slane %v645, %v649
    %652 = vmatprep.subr.mxu0 0.0
    %653 = vmatpush1.msra.mxu0 %v629
    %654 = vmatprep.subr.mxu0 0.0
    %655 = vmatpush1.msra.mxu0 %v630
    %656 = vmatprep.subr.mxu0 0.0
    %657 = vmatpush1.msra.mxu0 %v631
    %658 = vmatprep.subr.mxu0 0.0
    %659 = vmatpush1.msra.mxu0 %v632
    %660 = vmatprep.subr.mxu0 0.0
    %661 = vmatpush1.msra.mxu0 %v633
    %662 = vmatprep.subr.mxu0 0.0
    %663 = vmatpush1.msra.mxu0 %v634
    %664 = vmatprep.subr.mxu0 0.0
    %665 = vmatpush1.msra.mxu0 %v635
    %666 = vmatprep.subr.mxu0 0.0
    %667 = vmatpush1.msra.mxu0 %v636
    %668 = vmatprep.subr.mxu0 0.0
    %669 = vmatpush1.msra.mxu0 %v637
    %670 = vmatprep.subr.mxu0 0.0
    %671 = vmatpush1.msra.mxu0 %v638
    %672 = vmatprep.subr.mxu0 0.0
    %673 = vmatpush1.msra.mxu0 %v639
    %674 = vmatprep.subr.mxu0 0.0
    %675 = vmatpush1.msra.mxu0 %v640
    %676 = vmatprep.subr.mxu0 0.0
    %677 = vmatpush1.msra.mxu0 %v641
    %678 = vmatprep.subr.mxu0 0.0
    %679 = vmatpush1.msra.mxu0 %v642
    %680 = vmatprep.subr.mxu0 0.0
    %681 = vmatpush1.msra.mxu0 %v643
    %682 = vmatprep.subr.mxu0 0.0
    %683 = vmatpush1.msra.mxu0 %v644
    %684 = vmatprep.subr.mxu0 0.0
    %685 = vmatpush1.msra.mxu0 0.0
    %686 = vmatprep.subr.mxu0 0.0
    %687 = vmatpush1.msra.mxu0 0.0
    %688 = vmatprep.subr.mxu0 0.0
    %689 = vmatpush1.msra.mxu0 0.0
    %690 = vmatprep.subr.mxu0 0.0
    %691 = vmatpush1.msra.mxu0 0.0
    %692 = vmatprep.subr.mxu0 0.0
    %693 = vmatpush1.msra.mxu0 0.0
    %694 = vmatprep.subr.mxu0 0.0
    %695 = vmatpush1.msra.mxu0 0.0
    %696 = vmatprep.subr.mxu0 0.0
    %697 = vmatpush1.msra.mxu0 0.0
    %698 = vmatprep.subr.mxu0 0.0
    %699 = vmatpush1.msra.mxu0 0.0
    %700 = vmatprep.subr.mxu0 0.0
    %701 = vmatpush1.msra.mxu0 0.0
    %702 = vmatprep.subr.mxu0 0.0
    %703 = vmatpush1.msra.mxu0 0.0
    %704 = vmatprep.subr.mxu0 0.0
    %705 = vmatpush1.msra.mxu0 0.0
    %706 = vmatprep.subr.mxu0 0.0
    %707 = vmatpush1.msra.mxu0 0.0
    %708 = vmatprep.subr.mxu0 0.0
    %709 = vmatpush1.msra.mxu0 0.0
    %710 = vmatprep.subr.mxu0 0.0
    %711 = vmatpush1.msra.mxu0 0.0
    %712 = vmatprep.subr.mxu0 0.0
    %713 = vmatpush1.msra.mxu0 0.0
    %714 = vmatprep.subr.mxu0 0.0
    %715 = vmatpush1.msra.mxu0 0.0
    %716 = vmatprep.mubr.f32.mxu0 0.0
    %717 = vmatmul.mubr.f32.gmra.mrb[0].mxu0 %v621
    %v718 = vpop.f32.mrb[0].mxu0
    %v719 = vadd.f32 %v650, %v718
    %v720 = vpop.f32.mrb[0].mxu0
    %721 = vmatprep.mubr.f32.mxu0 0.0
    %722 = vmatmul.mubr.f32.gmra.mrb[0].mxu0 %v622
    %v723 = vpop.f32.mrb[0].mxu0
    %v724 = vadd.f32 %v650, %v723
    %v725 = vpop.f32.mrb[0].mxu0
    %726 = vmatprep.mubr.f32.mxu0 0.0
    %727 = vmatmul.mubr.f32.gmra.mrb[0].mxu0 %v623
    %v728 = vpop.f32.mrb[0].mxu0
    %v729 = vadd.f32 %v650, %v728
    %v730 = vpop.f32.mrb[0].mxu0
    %731 = vmatprep.mubr.f32.mxu0 0.0
    %732 = vmatmul.mubr.f32.gmra.mrb[0].mxu0 %v624
    %v733 = vpop.f32.mrb[0].mxu0
    %v734 = vadd.f32 %v650, %v733
    %v735 = vpop.f32.mrb[0].mxu0
    %736 = vmatprep.mubr.f32.mxu0 0.0
    %737 = vmatmul.mubr.f32.gmra.mrb[0].mxu0 %v625
    %v738 = vpop.f32.mrb[0].mxu0
    %v739 = vadd.f32 %v650, %v738
    %v740 = vpop.f32.mrb[0].mxu0
    %741 = vmatprep.mubr.f32.mxu0 0.0
    %742 = vmatmul.mubr.f32.gmra.mrb[0].mxu0 %v626
    %v743 = vpop.f32.mrb[0].mxu0
    %v744 = vadd.f32 %v650, %v743
    %v745 = vpop.f32.mrb[0].mxu0
    %746 = vmatprep.mubr.f32.mxu0 0.0
    %747 = vmatmul.mubr.f32.gmra.mrb[0].mxu0 %v627
    %v748 = vpop.f32.mrb[0].mxu0
    %v749 = vadd.f32 %v650, %v748
    %v750 = vpop.f32.mrb[0].mxu0
    %751 = vmatprep.mubr.f32.mxu0 0.0
    %752 = vmatmul.mubr.f32.gmra.mrb[0].mxu0 %v628
    %v753 = vpop.f32.mrb[0].mxu0
    %v754 = vadd.f32 %v650, %v753
    %v755 = vpop.f32.mrb[0].mxu0
    %756 = vdwg.mxu0
    %vm757 = vcmask 64512
    %758 = vst.msk [vmem:[%s11] sm:$0xff] %vm757, %v719
    %759 = vst.msk [vmem:[%s11 + $0x8] sm:$0xff] %vm757, %v724
    %760 = vst.msk [vmem:[%s11 + $0x10] sm:$0xff] %vm757, %v729
    %761 = vst.msk [vmem:[%s11 + $0x18] sm:$0xff] %vm757, %v734
    %762 = vst.msk [vmem:[%s11 + $0x20] sm:$0xff] %vm757, %v739
    %763 = vst.msk [vmem:[%s11 + $0x28] sm:$0xff] %vm757, %v744
    %764 = vst.msk [vmem:[%s11 + $0x30] sm:$0xff] %vm757, %v749
    %765 = vst.msk [vmem:[%s11 + $0x38] sm:$0xff] %vm757, %v754
    // Predicated region
    $region54: #{_policy_forward_impl.1} parent=1 // pred_check
      _
    $region55: #{_policy_forward_impl.1} parent=1 // pred_check_branch
      %767 = sbr.rel (0) target = $region57
    $region56: #{_policy_forward_impl.1} parent=1 // pred_region
      _
    $region57: #{_policy_forward_impl.1} parent=1 // pred_fallthru
      _
    // Predicated region
    $region58: #{_policy_forward_impl.1} parent=1 // pred_check
      _
    $region59: #{_policy_forward_impl.1} parent=1 // pred_check_branch
      %769 = sbr.rel (0) target = $region61
    $region60: #{_policy_forward_impl.1} parent=1 // pred_region
      _
    $region61: #{_policy_forward_impl.1} parent=1 // pred_fallthru
      _
    %770 = vsyncpa [#allocation3], 1
    %771 = vsyncpa [#allocation5], 1

</llo_original>
